<compile_context>
chip_gen: v5e
topology: v5e:2x2
jax: 0.10.0
libtpu: 0.0.40
codegen_flags: <defaults>
</compile_context>

<pallas_src>
import functools

import jax
import jax.numpy as jnp
from jax import lax
from jax.experimental import pallas as pl
from jax.experimental.pallas import tpu as pltpu


def _transformer_block_kernel(x_ref, hs_ref,
                              wq_ref, wkv_ref, wproj_ref, w1_ref, w2_ref,
                              cvec_ref, b1_ref,
                              xout_ref, hsattn_ref,
                              cat_ref,
                              *, num_heads, scale, eps):
    x = x_ref[0]                                   # (N, C) f32
    N, C = x.shape
    D = C // num_heads

    cv = cvec_ref[...]                             # (6, C) packed per-channel vectors
    bproj = cv[0:1, :]
    b2    = cv[1:2, :]
    g1    = cv[2:3, :]
    be1   = cv[3:4, :]
    g2    = cv[4:5, :]
    be2   = cv[5:6, :]

    # --- fused, full-width QKV projections: bf16 operands, f32 accumulation ---
    x_bf = x.astype(jnp.bfloat16)
    q_all  = jnp.dot(x_bf, wq_ref[...],  preferred_element_type=jnp.float32)   # (N, C)
    kv_all = jnp.dot(x_bf, wkv_ref[...], preferred_element_type=jnp.float32)   # (N, 2C)
    k_all = kv_all[:, :C]
    v_all = kv_all[:, C:]

    ones_row = jnp.ones((1, N), jnp.bfloat16)      # MXU column-sum helper
    col_sum = jnp.zeros((1, N), jnp.float32)       # sum over heads & queries of attn

    # num_heads is small & static -> unrolled.
    for h in range(num_heads):
        sl = slice(h * D, (h + 1) * D)
        q_h = q_all[:, sl].astype(jnp.bfloat16)    # (N, D)
        k_h = k_all[:, sl].astype(jnp.bfloat16)
        v_h = v_all[:, sl].astype(jnp.bfloat16)

        # q_h @ k_h^T without materializing a transpose; scores/softmax stay f32
        s = lax.dot_general(q_h, k_h, (((1,), (1,)), ((), ())),
                            preferred_element_type=jnp.float32) * scale        # (N, N)
        s = s - jnp.max(s, axis=-1, keepdims=True)
        e = jnp.exp(s)
        inv = pl.reciprocal(jnp.sum(e, axis=-1, keepdims=True), approx=True)
        p = e * inv                                 # softmax per query row (f32)
        p_bf = p.astype(jnp.bfloat16)

        # column sum over queries on the MXU (not an XLU sublane reduce)
        col_sum = col_sum + jnp.dot(ones_row, p_bf,
                                    preferred_element_type=jnp.float32)

        # head output into the concat scratch; projection happens once below
        cat_ref[:, sl] = jnp.dot(p_bf, v_h, preferred_element_type=jnp.float32)

    # --- single full-C output projection (full MXU contraction depth) ---
    xa = jnp.dot(cat_ref[...].astype(jnp.bfloat16), wproj_ref[...],
                 preferred_element_type=jnp.float32)                           # (N, C)

    # --- output projection bias, residual, LayerNorm 1 (f32 elementwise) ---
    x1 = x + xa + bproj
    mu1 = jnp.mean(x1, axis=-1, keepdims=True)
    var1 = jnp.mean((x1 - mu1) ** 2, axis=-1, keepdims=True)
    x1n = (x1 - mu1) * lax.rsqrt(var1 + eps) * g1 + be1

    # --- FFN: Linear -> ReLU -> Linear (bf16 matmul operands, f32 acc) ---
    h1 = jnp.dot(x1n.astype(jnp.bfloat16), w1_ref[...],
                 preferred_element_type=jnp.float32) + b1_ref[...]
    h1 = jnp.maximum(h1, 0.0)
    x2 = jnp.dot(h1.astype(jnp.bfloat16), w2_ref[...],
                 preferred_element_type=jnp.float32) + b2

    # --- residual + LayerNorm 2 ---
    y = x1n + x2
    mu2 = jnp.mean(y, axis=-1, keepdims=True)
    var2 = jnp.mean((y - mu2) ** 2, axis=-1, keepdims=True)
    yn = (y - mu2) * lax.rsqrt(var2 + eps) * g2 + be2

    # --- attn = softmax( sum_over_queries( mean_over_heads(attn) ) ) ---
    a = col_sum * (1.0 / num_heads)                # (1, N)
    a = a - jnp.max(a, axis=-1, keepdims=True)
    ea = jnp.exp(a)
    asm = ea / jnp.sum(ea, axis=-1, keepdims=True)  # exact norm (halting-score drift)

    xout_ref[0] = yn
    # packed small outputs: row 0 = haltingscore + attn, row 1 = attn
    hsattn_ref[0] = jnp.concatenate([hs_ref[0] + asm, asm], axis=0)


def vanilla_transformer_block_pallas(x, haltingscore, params, num_heads):
    B, N, C = x.shape
    FF = params["w1"].shape[0]
    scale = (C // num_heads) ** -0.5
    hs = haltingscore.reshape(B, 1, N).astype(jnp.float32)

    # pre-transpose all weights to (in, out) and cast to bf16 (MXU-native);
    # accumulation stays f32 inside the kernel.
    bf16 = jnp.bfloat16
    wq_t    = params["wq"].T.astype(bf16)          # (C, C)
    wkv_t   = params["wkv"].T.astype(bf16)         # (C, 2C): first C cols = K, rest = V
    wproj_t = params["wproj"].T.astype(bf16)       # (C, C)
    w1_t    = params["w1"].T.astype(bf16)          # (C, FF)
    w2_t    = params["w2"].T.astype(bf16)          # (FF, C)
    # pack the six per-channel vectors into one (6, C) array (one DMA instead of six)
    cvec = jnp.stack([params["bproj"], params["b2"], params["g1"],
                      params["be1"], params["g2"], params["be2"]],
                     axis=0).astype(jnp.float32)
    b1 = params["b1"].reshape(1, FF).astype(jnp.float32)

    def invariant_spec(shape):
        # grid-invariant operand: constant index map + single buffer (no pointless
        # double-buffering of weights -> half their VMEM footprint, key on v7x).
        zeros = (0,) * len(shape)
        return pl.BlockSpec(shape, lambda b, _z=zeros: _z,
                            pipeline_mode=pl.Buffered(1))

    kernel = functools.partial(_transformer_block_kernel,
                               num_heads=num_heads, scale=scale, eps=1e-5)

    in_specs = [
        pl.BlockSpec((1, N, C), lambda b: (b, 0, 0)),   # x
        pl.BlockSpec((1, 1, N), lambda b: (b, 0, 0)),   # haltingscore
        invariant_spec((C, C)),        # Wq^T      (bf16)
        invariant_spec((C, 2 * C)),    # Wkv^T     (bf16)
        invariant_spec((C, C)),        # Wproj^T   (bf16)
        invariant_spec((C, FF)),       # W1^T      (bf16)
        invariant_spec((FF, C)),       # W2^T      (bf16)
        invariant_spec((6, C)),        # packed bproj/b2/g1/be1/g2/be2 (f32)
        invariant_spec((1, FF)),       # b1 (f32)
    ]
    out_specs = [
        pl.BlockSpec((1, N, C), lambda b: (b, 0, 0)),   # x out
        pl.BlockSpec((1, 2, N), lambda b: (b, 0, 0)),   # packed [hs+attn, attn] out
    ]
    out_shape = [
        jax.ShapeDtypeStruct((B, N, C), jnp.float32),
        jax.ShapeDtypeStruct((B, 2, N), jnp.float32),
    ]

    # explicit scoped-VMEM budget from the actual footprint (+ headroom),
    # capped at v7x's per-core 64 MiB.
    f32_b, bf16_b = 4, 2
    weight_bytes = (wq_t.size + wkv_t.size + wproj_t.size
                    + w1_t.size + w2_t.size) * bf16_b
    small_bytes = (cvec.size + b1.size) * f32_b
    block_bytes = (N * C + N) * f32_b * 2 + (N * C + 2 * N) * f32_b * 2
    scratch_bytes = N * C * f32_b
    vmem_needed = weight_bytes + small_bytes + block_bytes + scratch_bytes
    vmem_limit = int(min(64 << 20, max(32 << 20, 4 * vmem_needed)))

    xout, hsattn = pl.pallas_call(
        kernel,
        grid=(B,),
        in_specs=in_specs,
        out_specs=out_specs,
        out_shape=out_shape,
        scratch_shapes=[pltpu.VMEM((N, C), jnp.float32)],   # head-output concat
        compiler_params=pltpu.CompilerParams(
            dimension_semantics=("parallel",),
            vmem_limit_bytes=vmem_limit),
    )(x, hs, wq_t, wkv_t, wproj_t, w1_t, w2_t, cvec, b1)

    return xout, hsattn[:, 0, :], hsattn[:, 1, :]


def _reference(x, haltingscore, params, num_heads):
    """Pure-JAX replica of the PyTorch forward pass (eval mode, dropout off)."""
    B, N, C = x.shape
    D = C // num_heads
    scale = D ** -0.5
    q = (x @ params["wq"].T).reshape(B, N, num_heads, D).transpose(0, 2, 1, 3)
    kv = (x @ params["wkv"].T).reshape(B, N, 2, num_heads, D).transpose(2, 0, 3, 1, 4)
    k, v = kv[0], kv[1]
    attn = jax.nn.softmax(jnp.einsum("bhnd,bhmd->bhnm", q, k) * scale, axis=-1)
    o = jnp.einsum("bhnm,bhmd->bhnd", attn, v).transpose(0, 2, 1, 3).reshape(B, N, C)
    o = o @ params["wproj"].T + params["bproj"]
    attn = attn.mean(axis=1)

    def ln(z, g, b):
        mu = z.mean(-1, keepdims=True)
        var = ((z - mu) ** 2).mean(-1, keepdims=True)
        return (z - mu) / jnp.sqrt(var + 1e-5) * g + b

    x1 = ln(x + o, params["g1"], params["be1"])
    x2 = jnp.maximum(x1 @ params["w1"].T + params["b1"], 0.0) @ params["w2"].T + params["b2"]
    xo = ln(x1 + x2, params["g2"], params["be2"])
    a = jax.nn.softmax(attn.sum(axis=1), axis=-1)
    return xo, haltingscore + a, a


if __name__ == "__main__":
    B, N, C, H, FF = 2, 8, 32, 4, 64

    key = jax.random.PRNGKey(0)
    ks = jax.random.split(key, 12)
    params = {
        "wq":    0.05 * jax.random.normal(ks[0], (C, C), jnp.float32),
        "wkv":   0.05 * jax.random.normal(ks[1], (2 * C, C), jnp.float32),
        "wproj": 0.05 * jax.random.normal(ks[2], (C, C), jnp.float32),
        "bproj": 0.05 * jax.random.normal(ks[3], (C,), jnp.float32),
        "w1":    0.05 * jax.random.normal(ks[4], (FF, C), jnp.float32),
        "b1":    0.05 * jax.random.normal(ks[5], (FF,), jnp.float32),
        "w2":    0.05 * jax.random.normal(ks[6], (C, FF), jnp.float32),
        "b2":    0.05 * jax.random.normal(ks[7], (C,), jnp.float32),
        "g1":    jnp.ones((C,), jnp.float32),
        "be1":   jnp.zeros((C,), jnp.float32),
        "g2":    jnp.ones((C,), jnp.float32),
        "be2":   jnp.zeros((C,), jnp.float32),
    }

    x = jax.random.normal(ks[8], (B, N, C), jnp.float32)
    haltingscore = jax.random.uniform(ks[9], (B, N), jnp.float32)

    x_out, hs_out, attn_out = vanilla_transformer_block_pallas(x, haltingscore, params, H)
    jax.block_until_ready((x_out, hs_out, attn_out))

    # sanity check vs. pure-JAX f32 reference (bf16 matmul operands in the kernel)
    xr, hsr, ar = _reference(x, haltingscore, params, H)
    assert x_out.shape == (B, N, C) and hs_out.shape == (B, N) and attn_out.shape == (B, N)
    assert jnp.allclose(x_out, xr, atol=3e-2, rtol=3e-2)
    assert jnp.allclose(hs_out, hsr, atol=3e-2, rtol=3e-2)
    assert jnp.allclose(attn_out, ar, atol=3e-2, rtol=3e-2)

    print("KERNEL_OK")
</pallas_src>

<mosaic_0001>
module attributes {stable_mosaic.version = 11 : i64} {
  func.func @_transformer_block_kernel(%arg0: i32, %arg1: memref<1x8x32xf32, #tpu.memory_space<vmem>>, %arg2: memref<1x1x8xf32, #tpu.memory_space<vmem>>, %arg3: memref<32x32xbf16, #tpu.memory_space<vmem>>, %arg4: memref<32x64xbf16, #tpu.memory_space<vmem>>, %arg5: memref<32x32xbf16, #tpu.memory_space<vmem>>, %arg6: memref<32x64xbf16, #tpu.memory_space<vmem>>, %arg7: memref<64x32xbf16, #tpu.memory_space<vmem>>, %arg8: memref<6x32xf32, #tpu.memory_space<vmem>>, %arg9: memref<1x64xf32, #tpu.memory_space<vmem>>, %arg10: memref<1x8x32xf32, #tpu.memory_space<vmem>>, %arg11: memref<1x2x8xf32, #tpu.memory_space<vmem>>, %arg12: memref<8x32xf32, #tpu.memory_space<vmem>>) attributes {dimension_semantics = [#tpu.dimension_semantics<parallel>], iteration_bounds = array<i64: 2>, scalar_prefetch = 0 : i64, scratch_operands = 1 : i64, tpu.core_type = #tpu.core_type<tc>, window_params = [{transform_indices = @transform_0, window_bounds = array<i64: 1, 8, 32>}, {transform_indices = @transform_1, window_bounds = array<i64: 1, 1, 8>}, {pipeline_mode = #tpu.pipeline_mode<synchronous>, transform_indices = @transform_2, window_bounds = array<i64: 32, 32>}, {pipeline_mode = #tpu.pipeline_mode<synchronous>, transform_indices = @transform_3, window_bounds = array<i64: 32, 64>}, {pipeline_mode = #tpu.pipeline_mode<synchronous>, transform_indices = @transform_4, window_bounds = array<i64: 32, 32>}, {pipeline_mode = #tpu.pipeline_mode<synchronous>, transform_indices = @transform_5, window_bounds = array<i64: 32, 64>}, {pipeline_mode = #tpu.pipeline_mode<synchronous>, transform_indices = @transform_6, window_bounds = array<i64: 64, 32>}, {pipeline_mode = #tpu.pipeline_mode<synchronous>, transform_indices = @transform_7, window_bounds = array<i64: 6, 32>}, {pipeline_mode = #tpu.pipeline_mode<synchronous>, transform_indices = @transform_8, window_bounds = array<i64: 1, 64>}, {transform_indices = @transform_9, window_bounds = array<i64: 1, 8, 32>}, {transform_indices = @transform_10, window_bounds = array<i64: 1, 2, 8>}]} {
    %c0 = arith.constant 0 : index
    %c0_0 = arith.constant 0 : index
    %c0_1 = arith.constant 0 : index
    %0 = vector.load %arg1[%c0, %c0_0, %c0_1] : memref<1x8x32xf32, #tpu.memory_space<vmem>>, vector<1x8x32xf32>
    %1 = vector.shape_cast %0 : vector<1x8x32xf32> to vector<8x32xf32>
    %c0_2 = arith.constant 0 : index
    %c0_3 = arith.constant 0 : index
    %2 = vector.load %arg8[%c0_2, %c0_3] : memref<6x32xf32, #tpu.memory_space<vmem>>, vector<6x32xf32>
    %3 = vector.extract_strided_slice %2 {offsets = [0, 0], sizes = [1, 32], strides = [1, 1]} : vector<6x32xf32> to vector<1x32xf32>
    %4 = vector.extract_strided_slice %2 {offsets = [1, 0], sizes = [1, 32], strides = [1, 1]} : vector<6x32xf32> to vector<1x32xf32>
    %5 = vector.extract_strided_slice %2 {offsets = [2, 0], sizes = [1, 32], strides = [1, 1]} : vector<6x32xf32> to vector<1x32xf32>
    %6 = vector.extract_strided_slice %2 {offsets = [3, 0], sizes = [1, 32], strides = [1, 1]} : vector<6x32xf32> to vector<1x32xf32>
    %7 = vector.extract_strided_slice %2 {offsets = [4, 0], sizes = [1, 32], strides = [1, 1]} : vector<6x32xf32> to vector<1x32xf32>
    %8 = vector.extract_strided_slice %2 {offsets = [5, 0], sizes = [1, 32], strides = [1, 1]} : vector<6x32xf32> to vector<1x32xf32>
    %9 = arith.truncf %1 : vector<8x32xf32> to vector<8x32xbf16>
    %c0_4 = arith.constant 0 : index
    %c0_5 = arith.constant 0 : index
    %10 = vector.load %arg3[%c0_4, %c0_5] : memref<32x32xbf16, #tpu.memory_space<vmem>>, vector<32x32xbf16>
    %cst = arith.constant dense<0.000000e+00> : vector<8x32xf32>
    %11 = tpu.matmul %9, %10, %cst {dimension_numbers = #tpu.dot_dimension_numbers<[1], [0], [0], [1], [0, 0, 1, 1], [], []>} : vector<8x32xbf16>, vector<32x32xbf16>, vector<8x32xf32> -> vector<8x32xf32>
    %c0_6 = arith.constant 0 : index
    %c0_7 = arith.constant 0 : index
    %12 = vector.load %arg4[%c0_6, %c0_7] : memref<32x64xbf16, #tpu.memory_space<vmem>>, vector<32x64xbf16>
    %cst_8 = arith.constant dense<0.000000e+00> : vector<8x64xf32>
    %13 = tpu.matmul %9, %12, %cst_8 {dimension_numbers = #tpu.dot_dimension_numbers<[1], [0], [0], [1], [0, 0, 1, 1], [], []>} : vector<8x32xbf16>, vector<32x64xbf16>, vector<8x64xf32> -> vector<8x64xf32>
    %14 = vector.extract_strided_slice %13 {offsets = [0, 0], sizes = [8, 32], strides = [1, 1]} : vector<8x64xf32> to vector<8x32xf32>
    %15 = vector.extract_strided_slice %13 {offsets = [0, 32], sizes = [8, 32], strides = [1, 1]} : vector<8x64xf32> to vector<8x32xf32>
    %cst_9 = arith.constant 1.000000e+00 : bf16
    %16 = vector.broadcast %cst_9 : bf16 to vector<1x8xbf16>
    %cst_10 = arith.constant 0.000000e+00 : f32
    %17 = vector.broadcast %cst_10 : f32 to vector<1x8xf32>
    %18 = vector.extract_strided_slice %11 {offsets = [0, 0], sizes = [8, 8], strides = [1, 1]} : vector<8x32xf32> to vector<8x8xf32>
    %19 = arith.truncf %18 : vector<8x8xf32> to vector<8x8xbf16>
    %20 = vector.extract_strided_slice %14 {offsets = [0, 0], sizes = [8, 8], strides = [1, 1]} : vector<8x32xf32> to vector<8x8xf32>
    %21 = arith.truncf %20 : vector<8x8xf32> to vector<8x8xbf16>
    %22 = vector.extract_strided_slice %15 {offsets = [0, 0], sizes = [8, 8], strides = [1, 1]} : vector<8x32xf32> to vector<8x8xf32>
    %23 = arith.truncf %22 : vector<8x8xf32> to vector<8x8xbf16>
    %cst_11 = arith.constant dense<0.000000e+00> : vector<8x8xf32>
    %24 = tpu.matmul %19, %21, %cst_11 {dimension_numbers = #tpu.dot_dimension_numbers<[1], [1], [0], [0], [0, 0, 1, 0], [], []>} : vector<8x8xbf16>, vector<8x8xbf16>, vector<8x8xf32> -> vector<8x8xf32>
    %cst_12 = arith.constant 0.353553385 : f32
    %25 = vector.broadcast %cst_12 : f32 to vector<8x8xf32>
    %26 = arith.mulf %24, %25 : vector<8x8xf32>
    %cst_13 = arith.constant dense<0xFF800000> : vector<8xf32>
    %27 = vector.multi_reduction <maximumf>, %26, %cst_13 [1] : vector<8x8xf32> to vector<8xf32>
    %28 = vector.shape_cast %27 : vector<8xf32> to vector<8x1xf32>
    %29 = vector.broadcast %28 : vector<8x1xf32> to vector<8x8xf32>
    %30 = arith.subf %26, %29 : vector<8x8xf32>
    %31 = math.exp %30 : vector<8x8xf32>
    %cst_14 = arith.constant dense<0.000000e+00> : vector<8xf32>
    %32 = vector.multi_reduction <add>, %31, %cst_14 [1] : vector<8x8xf32> to vector<8xf32>
    %33 = vector.shape_cast %32 : vector<8xf32> to vector<8x1xf32>
    %34 = tpu.reciprocal %33 {approx = true} : vector<8x1xf32> -> vector<8x1xf32>
    %35 = vector.broadcast %34 : vector<8x1xf32> to vector<8x8xf32>
    %36 = arith.mulf %31, %35 : vector<8x8xf32>
    %37 = arith.truncf %36 : vector<8x8xf32> to vector<8x8xbf16>
    %cst_15 = arith.constant dense<0.000000e+00> : vector<1x8xf32>
    %38 = tpu.matmul %16, %37, %cst_15 {dimension_numbers = #tpu.dot_dimension_numbers<[1], [0], [0], [1], [0, 0, 1, 1], [], []>} : vector<1x8xbf16>, vector<8x8xbf16>, vector<1x8xf32> -> vector<1x8xf32>
    %39 = arith.addf %17, %38 : vector<1x8xf32>
    %cst_16 = arith.constant dense<0.000000e+00> : vector<8x8xf32>
    %40 = tpu.matmul %37, %23, %cst_16 {dimension_numbers = #tpu.dot_dimension_numbers<[1], [0], [0], [1], [0, 0, 1, 1], [], []>} : vector<8x8xbf16>, vector<8x8xbf16>, vector<8x8xf32> -> vector<8x8xf32>
    %c0_17 = arith.constant 0 : index
    %c0_18 = arith.constant 0 : index
    %41 = vector.load %arg12[%c0_17, %c0_18] : memref<8x32xf32, #tpu.memory_space<vmem>>, vector<8x8xf32>
    tpu.vector_store %arg12[%c0_17, %c0_18], %40 {strides = array<i32>} : memref<8x32xf32, #tpu.memory_space<vmem>>, vector<8x8xf32>,
    %42 = vector.extract_strided_slice %11 {offsets = [0, 8], sizes = [8, 8], strides = [1, 1]} : vector<8x32xf32> to vector<8x8xf32>
    %43 = arith.truncf %42 : vector<8x8xf32> to vector<8x8xbf16>
    %44 = vector.extract_strided_slice %14 {offsets = [0, 8], sizes = [8, 8], strides = [1, 1]} : vector<8x32xf32> to vector<8x8xf32>
    %45 = arith.truncf %44 : vector<8x8xf32> to vector<8x8xbf16>
    %46 = vector.extract_strided_slice %15 {offsets = [0, 8], sizes = [8, 8], strides = [1, 1]} : vector<8x32xf32> to vector<8x8xf32>
    %47 = arith.truncf %46 : vector<8x8xf32> to vector<8x8xbf16>
    %cst_19 = arith.constant dense<0.000000e+00> : vector<8x8xf32>
    %48 = tpu.matmul %43, %45, %cst_19 {dimension_numbers = #tpu.dot_dimension_numbers<[1], [1], [0], [0], [0, 0, 1, 0], [], []>} : vector<8x8xbf16>, vector<8x8xbf16>, vector<8x8xf32> -> vector<8x8xf32>
    %cst_20 = arith.constant 0.353553385 : f32
    %49 = vector.broadcast %cst_20 : f32 to vector<8x8xf32>
    %50 = arith.mulf %48, %49 : vector<8x8xf32>
    %cst_21 = arith.constant dense<0xFF800000> : vector<8xf32>
    %51 = vector.multi_reduction <maximumf>, %50, %cst_21 [1] : vector<8x8xf32> to vector<8xf32>
    %52 = vector.shape_cast %51 : vector<8xf32> to vector<8x1xf32>
    %53 = vector.broadcast %52 : vector<8x1xf32> to vector<8x8xf32>
    %54 = arith.subf %50, %53 : vector<8x8xf32>
    %55 = math.exp %54 : vector<8x8xf32>
    %cst_22 = arith.constant dense<0.000000e+00> : vector<8xf32>
    %56 = vector.multi_reduction <add>, %55, %cst_22 [1] : vector<8x8xf32> to vector<8xf32>
    %57 = vector.shape_cast %56 : vector<8xf32> to vector<8x1xf32>
    %58 = tpu.reciprocal %57 {approx = true} : vector<8x1xf32> -> vector<8x1xf32>
    %59 = vector.broadcast %58 : vector<8x1xf32> to vector<8x8xf32>
    %60 = arith.mulf %55, %59 : vector<8x8xf32>
    %61 = arith.truncf %60 : vector<8x8xf32> to vector<8x8xbf16>
    %cst_23 = arith.constant dense<0.000000e+00> : vector<1x8xf32>
    %62 = tpu.matmul %16, %61, %cst_23 {dimension_numbers = #tpu.dot_dimension_numbers<[1], [0], [0], [1], [0, 0, 1, 1], [], []>} : vector<1x8xbf16>, vector<8x8xbf16>, vector<1x8xf32> -> vector<1x8xf32>
    %63 = arith.addf %39, %62 : vector<1x8xf32>
    %cst_24 = arith.constant dense<0.000000e+00> : vector<8x8xf32>
    %64 = tpu.matmul %61, %47, %cst_24 {dimension_numbers = #tpu.dot_dimension_numbers<[1], [0], [0], [1], [0, 0, 1, 1], [], []>} : vector<8x8xbf16>, vector<8x8xbf16>, vector<8x8xf32> -> vector<8x8xf32>
    %c0_25 = arith.constant 0 : index
    %c8 = arith.constant 8 : index
    %65 = vector.load %arg12[%c0_25, %c8] : memref<8x32xf32, #tpu.memory_space<vmem>>, vector<8x8xf32>
    tpu.vector_store %arg12[%c0_25, %c8], %64 {strides = array<i32>} : memref<8x32xf32, #tpu.memory_space<vmem>>, vector<8x8xf32>,
    %66 = vector.extract_strided_slice %11 {offsets = [0, 16], sizes = [8, 8], strides = [1, 1]} : vector<8x32xf32> to vector<8x8xf32>
    %67 = arith.truncf %66 : vector<8x8xf32> to vector<8x8xbf16>
    %68 = vector.extract_strided_slice %14 {offsets = [0, 16], sizes = [8, 8], strides = [1, 1]} : vector<8x32xf32> to vector<8x8xf32>
    %69 = arith.truncf %68 : vector<8x8xf32> to vector<8x8xbf16>
    %70 = vector.extract_strided_slice %15 {offsets = [0, 16], sizes = [8, 8], strides = [1, 1]} : vector<8x32xf32> to vector<8x8xf32>
    %71 = arith.truncf %70 : vector<8x8xf32> to vector<8x8xbf16>
    %cst_26 = arith.constant dense<0.000000e+00> : vector<8x8xf32>
    %72 = tpu.matmul %67, %69, %cst_26 {dimension_numbers = #tpu.dot_dimension_numbers<[1], [1], [0], [0], [0, 0, 1, 0], [], []>} : vector<8x8xbf16>, vector<8x8xbf16>, vector<8x8xf32> -> vector<8x8xf32>
    %cst_27 = arith.constant 0.353553385 : f32
    %73 = vector.broadcast %cst_27 : f32 to vector<8x8xf32>
    %74 = arith.mulf %72, %73 : vector<8x8xf32>
    %cst_28 = arith.constant dense<0xFF800000> : vector<8xf32>
    %75 = vector.multi_reduction <maximumf>, %74, %cst_28 [1] : vector<8x8xf32> to vector<8xf32>
    %76 = vector.shape_cast %75 : vector<8xf32> to vector<8x1xf32>
    %77 = vector.broadcast %76 : vector<8x1xf32> to vector<8x8xf32>
    %78 = arith.subf %74, %77 : vector<8x8xf32>
    %79 = math.exp %78 : vector<8x8xf32>
    %cst_29 = arith.constant dense<0.000000e+00> : vector<8xf32>
    %80 = vector.multi_reduction <add>, %79, %cst_29 [1] : vector<8x8xf32> to vector<8xf32>
    %81 = vector.shape_cast %80 : vector<8xf32> to vector<8x1xf32>
    %82 = tpu.reciprocal %81 {approx = true} : vector<8x1xf32> -> vector<8x1xf32>
    %83 = vector.broadcast %82 : vector<8x1xf32> to vector<8x8xf32>
    %84 = arith.mulf %79, %83 : vector<8x8xf32>
    %85 = arith.truncf %84 : vector<8x8xf32> to vector<8x8xbf16>
    %cst_30 = arith.constant dense<0.000000e+00> : vector<1x8xf32>
    %86 = tpu.matmul %16, %85, %cst_30 {dimension_numbers = #tpu.dot_dimension_numbers<[1], [0], [0], [1], [0, 0, 1, 1], [], []>} : vector<1x8xbf16>, vector<8x8xbf16>, vector<1x8xf32> -> vector<1x8xf32>
    %87 = arith.addf %63, %86 : vector<1x8xf32>
    %cst_31 = arith.constant dense<0.000000e+00> : vector<8x8xf32>
    %88 = tpu.matmul %85, %71, %cst_31 {dimension_numbers = #tpu.dot_dimension_numbers<[1], [0], [0], [1], [0, 0, 1, 1], [], []>} : vector<8x8xbf16>, vector<8x8xbf16>, vector<8x8xf32> -> vector<8x8xf32>
    %c0_32 = arith.constant 0 : index
    %c16 = arith.constant 16 : index
    %89 = vector.load %arg12[%c0_32, %c16] : memref<8x32xf32, #tpu.memory_space<vmem>>, vector<8x8xf32>
    tpu.vector_store %arg12[%c0_32, %c16], %88 {strides = array<i32>} : memref<8x32xf32, #tpu.memory_space<vmem>>, vector<8x8xf32>,
    %90 = vector.extract_strided_slice %11 {offsets = [0, 24], sizes = [8, 8], strides = [1, 1]} : vector<8x32xf32> to vector<8x8xf32>
    %91 = arith.truncf %90 : vector<8x8xf32> to vector<8x8xbf16>
    %92 = vector.extract_strided_slice %14 {offsets = [0, 24], sizes = [8, 8], strides = [1, 1]} : vector<8x32xf32> to vector<8x8xf32>
    %93 = arith.truncf %92 : vector<8x8xf32> to vector<8x8xbf16>
    %94 = vector.extract_strided_slice %15 {offsets = [0, 24], sizes = [8, 8], strides = [1, 1]} : vector<8x32xf32> to vector<8x8xf32>
    %95 = arith.truncf %94 : vector<8x8xf32> to vector<8x8xbf16>
    %cst_33 = arith.constant dense<0.000000e+00> : vector<8x8xf32>
    %96 = tpu.matmul %91, %93, %cst_33 {dimension_numbers = #tpu.dot_dimension_numbers<[1], [1], [0], [0], [0, 0, 1, 0], [], []>} : vector<8x8xbf16>, vector<8x8xbf16>, vector<8x8xf32> -> vector<8x8xf32>
    %cst_34 = arith.constant 0.353553385 : f32
    %97 = vector.broadcast %cst_34 : f32 to vector<8x8xf32>
    %98 = arith.mulf %96, %97 : vector<8x8xf32>
    %cst_35 = arith.constant dense<0xFF800000> : vector<8xf32>
    %99 = vector.multi_reduction <maximumf>, %98, %cst_35 [1] : vector<8x8xf32> to vector<8xf32>
    %100 = vector.shape_cast %99 : vector<8xf32> to vector<8x1xf32>
    %101 = vector.broadcast %100 : vector<8x1xf32> to vector<8x8xf32>
    %102 = arith.subf %98, %101 : vector<8x8xf32>
    %103 = math.exp %102 : vector<8x8xf32>
    %cst_36 = arith.constant dense<0.000000e+00> : vector<8xf32>
    %104 = vector.multi_reduction <add>, %103, %cst_36 [1] : vector<8x8xf32> to vector<8xf32>
    %105 = vector.shape_cast %104 : vector<8xf32> to vector<8x1xf32>
    %106 = tpu.reciprocal %105 {approx = true} : vector<8x1xf32> -> vector<8x1xf32>
    %107 = vector.broadcast %106 : vector<8x1xf32> to vector<8x8xf32>
    %108 = arith.mulf %103, %107 : vector<8x8xf32>
    %109 = arith.truncf %108 : vector<8x8xf32> to vector<8x8xbf16>
    %cst_37 = arith.constant dense<0.000000e+00> : vector<1x8xf32>
    %110 = tpu.matmul %16, %109, %cst_37 {dimension_numbers = #tpu.dot_dimension_numbers<[1], [0], [0], [1], [0, 0, 1, 1], [], []>} : vector<1x8xbf16>, vector<8x8xbf16>, vector<1x8xf32> -> vector<1x8xf32>
    %111 = arith.addf %87, %110 : vector<1x8xf32>
    %cst_38 = arith.constant dense<0.000000e+00> : vector<8x8xf32>
    %112 = tpu.matmul %109, %95, %cst_38 {dimension_numbers = #tpu.dot_dimension_numbers<[1], [0], [0], [1], [0, 0, 1, 1], [], []>} : vector<8x8xbf16>, vector<8x8xbf16>, vector<8x8xf32> -> vector<8x8xf32>
    %c0_39 = arith.constant 0 : index
    %c24 = arith.constant 24 : index
    %113 = vector.load %arg12[%c0_39, %c24] : memref<8x32xf32, #tpu.memory_space<vmem>>, vector<8x8xf32>
    tpu.vector_store %arg12[%c0_39, %c24], %112 {strides = array<i32>} : memref<8x32xf32, #tpu.memory_space<vmem>>, vector<8x8xf32>,
    %c0_40 = arith.constant 0 : index
    %c0_41 = arith.constant 0 : index
    %114 = vector.load %arg12[%c0_40, %c0_41] : memref<8x32xf32, #tpu.memory_space<vmem>>, vector<8x32xf32>
    %115 = arith.truncf %114 : vector<8x32xf32> to vector<8x32xbf16>
    %c0_42 = arith.constant 0 : index
    %c0_43 = arith.constant 0 : index
    %116 = vector.load %arg5[%c0_42, %c0_43] : memref<32x32xbf16, #tpu.memory_space<vmem>>, vector<32x32xbf16>
    %cst_44 = arith.constant dense<0.000000e+00> : vector<8x32xf32>
    %117 = tpu.matmul %115, %116, %cst_44 {dimension_numbers = #tpu.dot_dimension_numbers<[1], [0], [0], [1], [0, 0, 1, 1], [], []>} : vector<8x32xbf16>, vector<32x32xbf16>, vector<8x32xf32> -> vector<8x32xf32>
    %118 = arith.addf %1, %117 : vector<8x32xf32>
    %119 = vector.broadcast %3 : vector<1x32xf32> to vector<8x32xf32>
    %120 = arith.addf %118, %119 : vector<8x32xf32>
    %cst_45 = arith.constant dense<0.000000e+00> : vector<8xf32>
    %121 = vector.multi_reduction <add>, %120, %cst_45 [1] : vector<8x32xf32> to vector<8xf32>
    %122 = vector.shape_cast %121 : vector<8xf32> to vector<8x1xf32>
    %cst_46 = arith.constant 3.200000e+01 : f32
    %123 = vector.broadcast %cst_46 : f32 to vector<8x1xf32>
    %124 = arith.divf %122, %123 : vector<8x1xf32>
    %125 = vector.broadcast %124 : vector<8x1xf32> to vector<8x32xf32>
    %126 = arith.subf %120, %125 : vector<8x32xf32>
    %127 = arith.mulf %126, %126 : vector<8x32xf32>
    %cst_47 = arith.constant dense<0.000000e+00> : vector<8xf32>
    %128 = vector.multi_reduction <add>, %127, %cst_47 [1] : vector<8x32xf32> to vector<8xf32>
    %129 = vector.shape_cast %128 : vector<8xf32> to vector<8x1xf32>
    %cst_48 = arith.constant 3.200000e+01 : f32
    %130 = vector.broadcast %cst_48 : f32 to vector<8x1xf32>
    %131 = arith.divf %129, %130 : vector<8x1xf32>
    %132 = vector.broadcast %124 : vector<8x1xf32> to vector<8x32xf32>
    %133 = arith.subf %120, %132 : vector<8x32xf32>
    %cst_49 = arith.constant 9.99999974E-6 : f32
    %134 = vector.broadcast %cst_49 : f32 to vector<8x1xf32>
    %135 = arith.addf %131, %134 : vector<8x1xf32>
    %136 = math.rsqrt %135 : vector<8x1xf32>
    %137 = vector.broadcast %136 : vector<8x1xf32> to vector<8x32xf32>
    %138 = arith.mulf %133, %137 : vector<8x32xf32>
    %139 = vector.broadcast %5 : vector<1x32xf32> to vector<8x32xf32>
    %140 = arith.mulf %138, %139 : vector<8x32xf32>
    %141 = vector.broadcast %6 : vector<1x32xf32> to vector<8x32xf32>
    %142 = arith.addf %140, %141 : vector<8x32xf32>
    %143 = arith.truncf %142 : vector<8x32xf32> to vector<8x32xbf16>
    %c0_50 = arith.constant 0 : index
    %c0_51 = arith.constant 0 : index
    %144 = vector.load %arg6[%c0_50, %c0_51] : memref<32x64xbf16, #tpu.memory_space<vmem>>, vector<32x64xbf16>
    %cst_52 = arith.constant dense<0.000000e+00> : vector<8x64xf32>
    %145 = tpu.matmul %143, %144, %cst_52 {dimension_numbers = #tpu.dot_dimension_numbers<[1], [0], [0], [1], [0, 0, 1, 1], [], []>} : vector<8x32xbf16>, vector<32x64xbf16>, vector<8x64xf32> -> vector<8x64xf32>
    %c0_53 = arith.constant 0 : index
    %c0_54 = arith.constant 0 : index
    %146 = vector.load %arg9[%c0_53, %c0_54] : memref<1x64xf32, #tpu.memory_space<vmem>>, vector<1x64xf32>
    %147 = vector.broadcast %146 : vector<1x64xf32> to vector<8x64xf32>
    %148 = arith.addf %145, %147 : vector<8x64xf32>
    %cst_55 = arith.constant 0.000000e+00 : f32
    %149 = vector.broadcast %cst_55 : f32 to vector<8x64xf32>
    %150 = arith.maximumf %148, %149 : vector<8x64xf32>
    %151 = arith.truncf %150 : vector<8x64xf32> to vector<8x64xbf16>
    %c0_56 = arith.constant 0 : index
    %c0_57 = arith.constant 0 : index
    %152 = vector.load %arg7[%c0_56, %c0_57] : memref<64x32xbf16, #tpu.memory_space<vmem>>, vector<64x32xbf16>
    %cst_58 = arith.constant dense<0.000000e+00> : vector<8x32xf32>
    %153 = tpu.matmul %151, %152, %cst_58 {dimension_numbers = #tpu.dot_dimension_numbers<[1], [0], [0], [1], [0, 0, 1, 1], [], []>} : vector<8x64xbf16>, vector<64x32xbf16>, vector<8x32xf32> -> vector<8x32xf32>
    %154 = vector.broadcast %4 : vector<1x32xf32> to vector<8x32xf32>
    %155 = arith.addf %153, %154 : vector<8x32xf32>
    %156 = arith.addf %142, %155 : vector<8x32xf32>
    %cst_59 = arith.constant dense<0.000000e+00> : vector<8xf32>
    %157 = vector.multi_reduction <add>, %156, %cst_59 [1] : vector<8x32xf32> to vector<8xf32>
    %158 = vector.shape_cast %157 : vector<8xf32> to vector<8x1xf32>
    %cst_60 = arith.constant 3.200000e+01 : f32
    %159 = vector.broadcast %cst_60 : f32 to vector<8x1xf32>
    %160 = arith.divf %158, %159 : vector<8x1xf32>
    %161 = vector.broadcast %160 : vector<8x1xf32> to vector<8x32xf32>
    %162 = arith.subf %156, %161 : vector<8x32xf32>
    %163 = arith.mulf %162, %162 : vector<8x32xf32>
    %cst_61 = arith.constant dense<0.000000e+00> : vector<8xf32>
    %164 = vector.multi_reduction <add>, %163, %cst_61 [1] : vector<8x32xf32> to vector<8xf32>
    %165 = vector.shape_cast %164 : vector<8xf32> to vector<8x1xf32>
    %cst_62 = arith.constant 3.200000e+01 : f32
    %166 = vector.broadcast %cst_62 : f32 to vector<8x1xf32>
    %167 = arith.divf %165, %166 : vector<8x1xf32>
    %168 = vector.broadcast %160 : vector<8x1xf32> to vector<8x32xf32>
    %169 = arith.subf %156, %168 : vector<8x32xf32>
    %cst_63 = arith.constant 9.99999974E-6 : f32
    %170 = vector.broadcast %cst_63 : f32 to vector<8x1xf32>
    %171 = arith.addf %167, %170 : vector<8x1xf32>
    %172 = math.rsqrt %171 : vector<8x1xf32>
    %173 = vector.broadcast %172 : vector<8x1xf32> to vector<8x32xf32>
    %174 = arith.mulf %169, %173 : vector<8x32xf32>
    %175 = vector.broadcast %7 : vector<1x32xf32> to vector<8x32xf32>
    %176 = arith.mulf %174, %175 : vector<8x32xf32>
    %177 = vector.broadcast %8 : vector<1x32xf32> to vector<8x32xf32>
    %178 = arith.addf %176, %177 : vector<8x32xf32>
    %cst_64 = arith.constant 2.500000e-01 : f32
    %179 = vector.broadcast %cst_64 : f32 to vector<1x8xf32>
    %180 = arith.mulf %111, %179 : vector<1x8xf32>
    %cst_65 = arith.constant dense<0xFF800000> : vector<1xf32>
    %181 = vector.multi_reduction <maximumf>, %180, %cst_65 [1] : vector<1x8xf32> to vector<1xf32>
    %182 = vector.shape_cast %181 : vector<1xf32> to vector<1x1xf32>
    %183 = vector.broadcast %182 : vector<1x1xf32> to vector<1x8xf32>
    %184 = arith.subf %180, %183 : vector<1x8xf32>
    %185 = math.exp %184 : vector<1x8xf32>
    %cst_66 = arith.constant dense<0.000000e+00> : vector<1xf32>
    %186 = vector.multi_reduction <add>, %185, %cst_66 [1] : vector<1x8xf32> to vector<1xf32>
    %187 = vector.shape_cast %186 : vector<1xf32> to vector<1x1xf32>
    %188 = vector.broadcast %187 : vector<1x1xf32> to vector<1x8xf32>
    %189 = arith.divf %185, %188 : vector<1x8xf32>
    %c0_67 = arith.constant 0 : index
    %c0_68 = arith.constant 0 : index
    %c0_69 = arith.constant 0 : index
    %190 = vector.load %arg10[%c0_67, %c0_68, %c0_69] : memref<1x8x32xf32, #tpu.memory_space<vmem>>, vector<1x8x32xf32>
    %191 = vector.shape_cast %190 : vector<1x8x32xf32> to vector<8x32xf32>
    %192 = vector.shape_cast %178 : vector<8x32xf32> to vector<1x8x32xf32>
    tpu.vector_store %arg10[%c0_67, %c0_68, %c0_69], %192 {strides = array<i32>} : memref<1x8x32xf32, #tpu.memory_space<vmem>>, vector<1x8x32xf32>,
    %c0_70 = arith.constant 0 : index
    %c0_71 = arith.constant 0 : index
    %c0_72 = arith.constant 0 : index
    %193 = vector.load %arg2[%c0_70, %c0_71, %c0_72] : memref<1x1x8xf32, #tpu.memory_space<vmem>>, vector<1x1x8xf32>
    %194 = vector.shape_cast %193 : vector<1x1x8xf32> to vector<1x8xf32>
    %195 = arith.addf %194, %189 : vector<1x8xf32>
    %196 = tpu.concatenate %195, %189 in 0 : vector<1x8xf32>, vector<1x8xf32> -> vector<2x8xf32>
    %c0_73 = arith.constant 0 : index
    %c0_74 = arith.constant 0 : index
    %c0_75 = arith.constant 0 : index
    %197 = vector.load %arg11[%c0_73, %c0_74, %c0_75] : memref<1x2x8xf32, #tpu.memory_space<vmem>>, vector<1x2x8xf32>
    %198 = vector.shape_cast %197 : vector<1x2x8xf32> to vector<2x8xf32>
    %199 = vector.shape_cast %196 : vector<2x8xf32> to vector<1x2x8xf32>
    tpu.vector_store %arg11[%c0_73, %c0_74, %c0_75], %199 {strides = array<i32>} : memref<1x2x8xf32, #tpu.memory_space<vmem>>, vector<1x2x8xf32>,
    return
  }
  func.func @transform_0(%arg0: i32) -> (i32, i32, i32) {
    %c0_i32 = arith.constant 0 : i32
    %c0_i32_0 = arith.constant 0 : i32
    %c0_i32_1 = arith.constant 0 : i32
    return %arg0, %c0_i32, %c0_i32_0 : i32, i32, i32
  }
  func.func @transform_1(%arg0: i32) -> (i32, i32, i32) {
    %c0_i32 = arith.constant 0 : i32
    %c0_i32_0 = arith.constant 0 : i32
    %c0_i32_1 = arith.constant 0 : i32
    return %arg0, %c0_i32, %c0_i32_0 : i32, i32, i32
  }
  func.func @transform_2(%arg0: i32) -> (i32, i32) {
    %c0_i32 = arith.constant 0 : i32
    %c0_i32_0 = arith.constant 0 : i32
    %c0_i32_1 = arith.constant 0 : i32
    return %c0_i32, %c0_i32_0 : i32, i32
  }
  func.func @transform_3(%arg0: i32) -> (i32, i32) {
    %c0_i32 = arith.constant 0 : i32
    %c0_i32_0 = arith.constant 0 : i32
    %c0_i32_1 = arith.constant 0 : i32
    return %c0_i32, %c0_i32_0 : i32, i32
  }
  func.func @transform_4(%arg0: i32) -> (i32, i32) {
    %c0_i32 = arith.constant 0 : i32
    %c0_i32_0 = arith.constant 0 : i32
    %c0_i32_1 = arith.constant 0 : i32
    return %c0_i32, %c0_i32_0 : i32, i32
  }
  func.func @transform_5(%arg0: i32) -> (i32, i32) {
    %c0_i32 = arith.constant 0 : i32
    %c0_i32_0 = arith.constant 0 : i32
    %c0_i32_1 = arith.constant 0 : i32
    return %c0_i32, %c0_i32_0 : i32, i32
  }
  func.func @transform_6(%arg0: i32) -> (i32, i32) {
    %c0_i32 = arith.constant 0 : i32
    %c0_i32_0 = arith.constant 0 : i32
    %c0_i32_1 = arith.constant 0 : i32
    return %c0_i32, %c0_i32_0 : i32, i32
  }
  func.func @transform_7(%arg0: i32) -> (i32, i32) {
    %c0_i32 = arith.constant 0 : i32
    %c0_i32_0 = arith.constant 0 : i32
    %c0_i32_1 = arith.constant 0 : i32
    return %c0_i32, %c0_i32_0 : i32, i32
  }
  func.func @transform_8(%arg0: i32) -> (i32, i32) {
    %c0_i32 = arith.constant 0 : i32
    %c0_i32_0 = arith.constant 0 : i32
    %c0_i32_1 = arith.constant 0 : i32
    return %c0_i32, %c0_i32_0 : i32, i32
  }
  func.func @transform_9(%arg0: i32) -> (i32, i32, i32) {
    %c0_i32 = arith.constant 0 : i32
    %c0_i32_0 = arith.constant 0 : i32
    %c0_i32_1 = arith.constant 0 : i32
    return %arg0, %c0_i32, %c0_i32_0 : i32, i32, i32
  }
  func.func @transform_10(%arg0: i32) -> (i32, i32, i32) {
    %c0_i32 = arith.constant 0 : i32
    %c0_i32_0 = arith.constant 0 : i32
    %c0_i32_1 = arith.constant 0 : i32
    return %arg0, %c0_i32, %c0_i32_0 : i32, i32, i32
  }
}

</mosaic_0001>

<llo_original>
// kernel: tpu_custom_call.1
$region0: #{tpu_custom_call.1}
  #allocation0 [shape = 'u32[]', space=smem, size = 0x4, offset = 0x4, fixed_abs, tag = 'smem constant byte address 0x4 - core index']
  #allocation1 [shape = 'u32[72,128]{1,0:T(1,128)}', space=vmem, size = 0x9000, scoped, tag = 'internal scratch']
  #allocation2 [shape = 'f32[8,32]{1,0:T(8,128)}', space=vmem, size = 0x1000, scoped, tag = 'scratch operand']
  %s0 = inlined_call_operand.vmem [shape: f32[2,8,32], index: 0, kind: input, shape index: {}]
  %s1 = inlined_call_operand.hbm [shape: f32[2,1,8], index: 1, kind: input, shape index: {}]
  %s2 = inlined_call_operand.vmem [shape: bf16[32,32], index: 2, kind: input, shape index: {}]
  %s3 = inlined_call_operand.vmem [shape: bf16[32,64], index: 3, kind: input, shape index: {}]
  %s4 = inlined_call_operand.hbm [shape: bf16[32,32], index: 4, kind: input, shape index: {}]
  %s5 = inlined_call_operand.hbm [shape: bf16[32,64], index: 5, kind: input, shape index: {}]
  %s6 = inlined_call_operand.vmem [shape: bf16[64,32], index: 6, kind: input, shape index: {}]
  %s7 = inlined_call_operand.hbm [shape: f32[6,32], index: 7, kind: input, shape index: {}]
  %s8 = inlined_call_operand.vmem [shape: f32[1,64], index: 8, kind: input, shape index: {}]
  %s9 = inlined_call_operand.hbm [shape: f32[2,8,32], index: 9, kind: output, shape index: {0}]
  %s10 = inlined_call_operand.hbm [shape: f32[2,2,8], index: 10, kind: output, shape index: {1}]
  %11 = xla_tuple %s9, %s10
  %s12 = sld [smem:[#allocation0]]
  $region93: #{tpu_custom_call.1} parent=0
    _
  %s14 = ssub.s32 1, %s12
  %s15 = scalar_select 0, %s14, %s12
  $region1: #{tpu_custom_call.1} parent=0
    #allocation3 [shape = 'u8[1024]{0}', space=vmem, size = 0x400, scoped, tag = 'input window, operand 1']
    #allocation4 [shape = 's32[2]{0}', space=sflag, size = 0x8, scoped, tag = 'scoped memory for tpu_custom_call.1']
    #allocation5 [shape = 's32[2]{0}', space=sflag, size = 0x8, scoped, tag = 'scoped memory for tpu_custom_call.1']
    #allocation6 [shape = 'u8[8192]{0}', space=vmem, size = 0x2000, scoped, tag = 'input window, operand 4, single buffered']
    #allocation7 [shape = 's32[1]{0}', space=sflag, size = 0x4, scoped, tag = 'scoped memory for tpu_custom_call.1']
    #allocation8 [shape = 'u8[8192]{0}', space=vmem, size = 0x2000, scoped, tag = 'input window, operand 5, single buffered']
    #allocation9 [shape = 'u8[4096]{0}', space=vmem, size = 0x1000, scoped, tag = 'input window, operand 7, single buffered']
    #allocation10 [shape = 's32[1]{0}', space=sflag, size = 0x4, scoped, tag = 'scoped memory for tpu_custom_call.1']
    #allocation11 [shape = 'u8[8192]{0}', space=vmem, size = 0x2000, scoped, tag = 'output window, operand 0']
    #allocation12 [shape = 'u8[2048]{0}', space=vmem, size = 0x800, scoped, tag = 'output window, operand 1']
    #allocation13 [shape = 's32[2]{0}', space=sflag, size = 0x8, scoped, tag = 'scoped memory for tpu_custom_call.1']
    %16 = vsyncpa [#allocation4], 0
    %s17 = scalar_lea.sflag [#allocation4], 1
    %18 = vsyncpa %s17, 0
    %19 = vsyncpa [#allocation7], 0
    %20 = vsyncpa [#allocation10], 0
    %21 = vsyncpa [#allocation5], 0
    %s22 = scalar_lea.sflag [#allocation5], 1
    %23 = vsyncpa %s22, 0
    %24 = vsyncpa [#allocation13], 0
    %s25 = scalar_lea.sflag [#allocation13], 1
    %26 = vsyncpa %s25, 0
    loop: start=0, step=1, limit=4
    $region2: #{tpu_custom_call.1} parent=1 // loop_pre_header
      _
    $region3: #{tpu_custom_call.1} parent=1 // loop_header
      %s28 = sphi 0, %s32
      %p29 = scmp.ge.s32.totalorder %s28, 4
      %s38 = sphi 0, %s40
      %s41 = sphi 0, %s38
      %s42 = sphi 0, %s41
      %s58 = sphi 0, %s42
      %s64 = sphi 0, %s66
      %s67 = sphi 0, %s64
      %s68 = sphi 0, %s67
      %s84 = sphi 0, %s68
      %s88 = sphi 0, %s88
      %s90 = sphi 0, %s88
      %s91 = sphi 0, %s90
      %s105 = sphi 0, %s91
      %s109 = sphi 0, %s109
      %s111 = sphi 0, %s109
      %s112 = sphi 0, %s111
      %s126 = sphi 0, %s112
      %s130 = sphi 0, %s130
      %s132 = sphi 0, %s130
      %s133 = sphi 0, %s132
      %s147 = sphi 0, %s133
      %s151 = sphi 0, %s151
      %s153 = sphi 0, %s151
      %s154 = sphi 0, %s153
      %s168 = sphi 0, %s154
      %s172 = sphi 0, %s172
      %s174 = sphi 0, %s172
      %s175 = sphi 0, %s174
      %s189 = sphi 0, %s175
      %s193 = sphi 0, %s193
      %s195 = sphi 0, %s193
      %s196 = sphi 0, %s195
      %s210 = sphi 0, %s196
      %s214 = sphi 0, %s214
      %s216 = sphi 0, %s214
      %s217 = sphi 0, %s216
      %s231 = sphi 0, %s217
      %s237 = sphi 0, %s239
      %s240 = sphi 0, %s237
      %s241 = sphi 0, %s240
      %s257 = sphi 0, %s241
      %s263 = sphi 0, %s265
      %s266 = sphi 0, %s263
      %s267 = sphi 0, %s266
      %s283 = sphi 0, %s267
    $region4: #{tpu_custom_call.1} parent=1 // loop_header_branch
      %31 = sbr.rel (%p29) target = $region8
    $region5: #{tpu_custom_call.1} parent=1 // loop_body
      %s33 = ssub.s32 %s28, 1
      %s34 = ssub.s32 %s28, 2
      %s35 = sadd.s32 %s28, 1
      %s36 = ssub.s32 %s28, %s35
      %p37 = scmp.eq.s32.totalorder %s36, 0
      %s39 = sadd.s32 %s38, 1
      %s40 = scalar_select %p37, %s38, %s39
      %p43 = pneg %p37
      %p44 = scmp.eq.s32.totalorder %s28, 1
      %p45 = por %p43, %p44
      %p46 = scmp.ne.s32.totalorder %s38, %s41
      %p47 = scmp.eq.s32.totalorder %s28, 0
      %p48 = por %p46, %p47
      %p49 = scmp.ne.s32.totalorder %s38, %s41
      %p50 = scmp.eq.s32.totalorder %s33, 1
      %p51 = por %p49, %p50
      %p52 = scmp.ne.s32.totalorder %s41, %s42
      %p53 = scmp.eq.s32.totalorder %s33, 0
      %p54 = por %p52, %p53
      %p55 = scmp.ne.s32.totalorder %s41, %s42
      %p56 = scmp.eq.s32.totalorder %s34, 1
      %p57 = por %p55, %p56
      %p59 = scmp.ne.s32.totalorder %s42, %s58
      %p60 = scmp.eq.s32.totalorder %s34, 0
      %p61 = por %p59, %p60
      %s62 = ssub.s32 %s28, %s35
      %p63 = scmp.eq.s32.totalorder %s62, 0
      %s65 = sadd.s32 %s64, 1
      %s66 = scalar_select %p63, %s64, %s65
      %p69 = pneg %p63
      %p70 = scmp.eq.s32.totalorder %s28, 1
      %p71 = por %p69, %p70
      %p72 = scmp.ne.s32.totalorder %s64, %s67
      %p73 = scmp.eq.s32.totalorder %s28, 0
      %p74 = por %p72, %p73
      %p75 = scmp.ne.s32.totalorder %s64, %s67
      %p76 = scmp.eq.s32.totalorder %s33, 1
      %p77 = por %p75, %p76
      %p78 = scmp.ne.s32.totalorder %s67, %s68
      %p79 = scmp.eq.s32.totalorder %s33, 0
      %p80 = por %p78, %p79
      %p81 = scmp.ne.s32.totalorder %s67, %s68
      %p82 = scmp.eq.s32.totalorder %s34, 1
      %p83 = por %p81, %p82
      %p85 = scmp.ne.s32.totalorder %s68, %s84
      %p86 = scmp.eq.s32.totalorder %s34, 0
      %p87 = por %p85, %p86
      %s89 = sadd.s32 %s88, 1
      %p92 = scmp.eq.s32.totalorder %s28, 1
      %p93 = scmp.ne.s32.totalorder %s88, %s90
      %p94 = scmp.eq.s32.totalorder %s28, 0
      %p95 = por %p93, %p94
      %p96 = scmp.ne.s32.totalorder %s88, %s90
      %p97 = scmp.eq.s32.totalorder %s33, 1
      %p98 = por %p96, %p97
      %p99 = scmp.ne.s32.totalorder %s90, %s91
      %p100 = scmp.eq.s32.totalorder %s33, 0
      %p101 = por %p99, %p100
      %p102 = scmp.ne.s32.totalorder %s90, %s91
      %p103 = scmp.eq.s32.totalorder %s34, 1
      %p104 = por %p102, %p103
      %p106 = scmp.ne.s32.totalorder %s91, %s105
      %p107 = scmp.eq.s32.totalorder %s34, 0
      %p108 = por %p106, %p107
      %s110 = sadd.s32 %s109, 1
      %p113 = scmp.eq.s32.totalorder %s28, 1
      %p114 = scmp.ne.s32.totalorder %s109, %s111
      %p115 = scmp.eq.s32.totalorder %s28, 0
      %p116 = por %p114, %p115
      %p117 = scmp.ne.s32.totalorder %s109, %s111
      %p118 = scmp.eq.s32.totalorder %s33, 1
      %p119 = por %p117, %p118
      %p120 = scmp.ne.s32.totalorder %s111, %s112
      %p121 = scmp.eq.s32.totalorder %s33, 0
      %p122 = por %p120, %p121
      %p123 = scmp.ne.s32.totalorder %s111, %s112
      %p124 = scmp.eq.s32.totalorder %s34, 1
      %p125 = por %p123, %p124
      %p127 = scmp.ne.s32.totalorder %s112, %s126
      %p128 = scmp.eq.s32.totalorder %s34, 0
      %p129 = por %p127, %p128
      %s131 = sadd.s32 %s130, 1
      %p134 = scmp.eq.s32.totalorder %s28, 1
      %p135 = scmp.ne.s32.totalorder %s130, %s132
      %p136 = scmp.eq.s32.totalorder %s28, 0
      %p137 = por %p135, %p136
      %p138 = scmp.ne.s32.totalorder %s130, %s132
      %p139 = scmp.eq.s32.totalorder %s33, 1
      %p140 = por %p138, %p139
      %p141 = scmp.ne.s32.totalorder %s132, %s133
      %p142 = scmp.eq.s32.totalorder %s33, 0
      %p143 = por %p141, %p142
      %p144 = scmp.ne.s32.totalorder %s132, %s133
      %p145 = scmp.eq.s32.totalorder %s34, 1
      %p146 = por %p144, %p145
      %p148 = scmp.ne.s32.totalorder %s133, %s147
      %p149 = scmp.eq.s32.totalorder %s34, 0
      %p150 = por %p148, %p149
      %s152 = sadd.s32 %s151, 1
      %p155 = scmp.eq.s32.totalorder %s28, 1
      %p156 = scmp.ne.s32.totalorder %s151, %s153
      %p157 = scmp.eq.s32.totalorder %s28, 0
      %p158 = por %p156, %p157
      %p159 = scmp.ne.s32.totalorder %s151, %s153
      %p160 = scmp.eq.s32.totalorder %s33, 1
      %p161 = por %p159, %p160
      %p162 = scmp.ne.s32.totalorder %s153, %s154
      %p163 = scmp.eq.s32.totalorder %s33, 0
      %p164 = por %p162, %p163
      %p165 = scmp.ne.s32.totalorder %s153, %s154
      %p166 = scmp.eq.s32.totalorder %s34, 1
      %p167 = por %p165, %p166
      %p169 = scmp.ne.s32.totalorder %s154, %s168
      %p170 = scmp.eq.s32.totalorder %s34, 0
      %p171 = por %p169, %p170
      %s173 = sadd.s32 %s172, 1
      %p176 = scmp.eq.s32.totalorder %s28, 1
      %p177 = scmp.ne.s32.totalorder %s172, %s174
      %p178 = scmp.eq.s32.totalorder %s28, 0
      %p179 = por %p177, %p178
      %p180 = scmp.ne.s32.totalorder %s172, %s174
      %p181 = scmp.eq.s32.totalorder %s33, 1
      %p182 = por %p180, %p181
      %p183 = scmp.ne.s32.totalorder %s174, %s175
      %p184 = scmp.eq.s32.totalorder %s33, 0
      %p185 = por %p183, %p184
      %p186 = scmp.ne.s32.totalorder %s174, %s175
      %p187 = scmp.eq.s32.totalorder %s34, 1
      %p188 = por %p186, %p187
      %p190 = scmp.ne.s32.totalorder %s175, %s189
      %p191 = scmp.eq.s32.totalorder %s34, 0
      %p192 = por %p190, %p191
      %s194 = sadd.s32 %s193, 1
      %p197 = scmp.eq.s32.totalorder %s28, 1
      %p198 = scmp.ne.s32.totalorder %s193, %s195
      %p199 = scmp.eq.s32.totalorder %s28, 0
      %p200 = por %p198, %p199
      %p201 = scmp.ne.s32.totalorder %s193, %s195
      %p202 = scmp.eq.s32.totalorder %s33, 1
      %p203 = por %p201, %p202
      %p204 = scmp.ne.s32.totalorder %s195, %s196
      %p205 = scmp.eq.s32.totalorder %s33, 0
      %p206 = por %p204, %p205
      %p207 = scmp.ne.s32.totalorder %s195, %s196
      %p208 = scmp.eq.s32.totalorder %s34, 1
      %p209 = por %p207, %p208
      %p211 = scmp.ne.s32.totalorder %s196, %s210
      %p212 = scmp.eq.s32.totalorder %s34, 0
      %p213 = por %p211, %p212
      %s215 = sadd.s32 %s214, 1
      %p218 = scmp.eq.s32.totalorder %s28, 1
      %p219 = scmp.ne.s32.totalorder %s214, %s216
      %p220 = scmp.eq.s32.totalorder %s28, 0
      %p221 = por %p219, %p220
      %p222 = scmp.ne.s32.totalorder %s214, %s216
      %p223 = scmp.eq.s32.totalorder %s33, 1
      %p224 = por %p222, %p223
      %p225 = scmp.ne.s32.totalorder %s216, %s217
      %p226 = scmp.eq.s32.totalorder %s33, 0
      %p227 = por %p225, %p226
      %p228 = scmp.ne.s32.totalorder %s216, %s217
      %p229 = scmp.eq.s32.totalorder %s34, 1
      %p230 = por %p228, %p229
      %p232 = scmp.ne.s32.totalorder %s217, %s231
      %p233 = scmp.eq.s32.totalorder %s34, 0
      %p234 = por %p232, %p233
      %s235 = ssub.s32 %s28, %s35
      %p236 = scmp.eq.s32.totalorder %s235, 0
      %s238 = sadd.s32 %s237, 1
      %s239 = scalar_select %p236, %s237, %s238
      %p242 = pneg %p236
      %p243 = scmp.eq.s32.totalorder %s28, 1
      %p244 = por %p242, %p243
      %p245 = scmp.ne.s32.totalorder %s237, %s240
      %p246 = scmp.eq.s32.totalorder %s28, 0
      %p247 = por %p245, %p246
      %p248 = scmp.ne.s32.totalorder %s237, %s240
      %p249 = scmp.eq.s32.totalorder %s33, 1
      %p250 = por %p248, %p249
      %p251 = scmp.ne.s32.totalorder %s240, %s241
      %p252 = scmp.eq.s32.totalorder %s33, 0
      %p253 = por %p251, %p252
      %p254 = scmp.ne.s32.totalorder %s240, %s241
      %p255 = scmp.eq.s32.totalorder %s34, 1
      %p256 = por %p254, %p255
      %p258 = scmp.ne.s32.totalorder %s241, %s257
      %p259 = scmp.eq.s32.totalorder %s34, 0
      %p260 = por %p258, %p259
      %s261 = ssub.s32 %s28, %s35
      %p262 = scmp.eq.s32.totalorder %s261, 0
      %s264 = sadd.s32 %s263, 1
      %s265 = scalar_select %p262, %s263, %s264
      %p268 = pneg %p262
      %p269 = scmp.eq.s32.totalorder %s28, 1
      %p270 = por %p268, %p269
      %p271 = scmp.ne.s32.totalorder %s263, %s266
      %p272 = scmp.eq.s32.totalorder %s28, 0
      %p273 = por %p271, %p272
      %p274 = scmp.ne.s32.totalorder %s263, %s266
      %p275 = scmp.eq.s32.totalorder %s33, 1
      %p276 = por %p274, %p275
      %p277 = scmp.ne.s32.totalorder %s266, %s267
      %p278 = scmp.eq.s32.totalorder %s33, 0
      %p279 = por %p277, %p278
      %p280 = scmp.ne.s32.totalorder %s266, %s267
      %p281 = scmp.eq.s32.totalorder %s34, 1
      %p282 = por %p280, %p281
      %p284 = scmp.ne.s32.totalorder %s267, %s283
      %p285 = scmp.eq.s32.totalorder %s34, 0
      %p286 = por %p284, %p285
      %p287 = scmp.le.s32.totalorder 1, %s28
      %p288 = scmp.lt.s32.totalorder %s28, 3
      %p289 = pnand %p287, %p288
      %p290 = pneg %p289
      // Predicated region
      $region9: #{tpu_custom_call.1} parent=5 // pred_check
        _
      $region10: #{tpu_custom_call.1} parent=5 // pred_check_branch
        %292 = sbr.rel (%p289) target = $region12
      $region11: #{tpu_custom_call.1} parent=5 // pred_region
        %s293 = ssub.s32 %s28, 1
        // Predicated region
        $region13: #{tpu_custom_call.1} parent=11 // pred_check
          %p294 = pneg %p101
        $region14: #{tpu_custom_call.1} parent=11 // pred_check_branch
          %296 = sbr.rel (%p294) target = $region16
        $region15: #{tpu_custom_call.1} parent=11 // pred_region
          _
        $region16: #{tpu_custom_call.1} parent=11 // pred_fallthru
          _
        // Predicated region
        $region17: #{tpu_custom_call.1} parent=11 // pred_check
          %p297 = pneg %p122
        $region18: #{tpu_custom_call.1} parent=11 // pred_check_branch
          %299 = sbr.rel (%p297) target = $region20
        $region19: #{tpu_custom_call.1} parent=11 // pred_region
          _
        $region20: #{tpu_custom_call.1} parent=11 // pred_fallthru
          _
        // Predicated region
        $region21: #{tpu_custom_call.1} parent=11 // pred_check
          %p300 = pneg %p143
        $region22: #{tpu_custom_call.1} parent=11 // pred_check_branch
          %302 = sbr.rel (%p300) target = $region24
        $region23: #{tpu_custom_call.1} parent=11 // pred_region
          %304 = vsyncadd [#allocation7], 0
          %s305 = sshll.u32 %s4, 4
          %s306 = int_to_ptr.hbm [resolvable:$true] %s305
          %s307 = sshll.u32 [#allocation6], 4
          %s308 = int_to_ptr.vmem [resolvable:$true] %s307
          %313 = dma.hbm_to_vmem [thread:$0]  %s306, 256, %s308, [#allocation7], 64, 64, 4
        $region24: #{tpu_custom_call.1} parent=11 // pred_fallthru
          _
        // Predicated region
        $region25: #{tpu_custom_call.1} parent=11 // pred_check
          %p314 = pneg %p164
        $region26: #{tpu_custom_call.1} parent=11 // pred_check_branch
          %316 = sbr.rel (%p314) target = $region28
        $region27: #{tpu_custom_call.1} parent=11 // pred_region
          %318 = vsyncadd [#allocation7], 0
          %s319 = sshll.u32 %s5, 4
          %s320 = int_to_ptr.hbm [resolvable:$true] %s319
          %s321 = sshll.u32 [#allocation8], 4
          %s322 = int_to_ptr.vmem [resolvable:$true] %s321
          %327 = dma.hbm_to_vmem [thread:$0]  %s320, 256, %s322, [#allocation7], 64, 64, 4
        $region28: #{tpu_custom_call.1} parent=11 // pred_fallthru
          _
        // Predicated region
        $region29: #{tpu_custom_call.1} parent=11 // pred_check
          %p328 = pneg %p185
        $region30: #{tpu_custom_call.1} parent=11 // pred_check_branch
          %330 = sbr.rel (%p328) target = $region32
        $region31: #{tpu_custom_call.1} parent=11 // pred_region
          _
        $region32: #{tpu_custom_call.1} parent=11 // pred_fallthru
          _
        // Predicated region
        $region33: #{tpu_custom_call.1} parent=11 // pred_check
          %p331 = pneg %p206
        $region34: #{tpu_custom_call.1} parent=11 // pred_check_branch
          %333 = sbr.rel (%p331) target = $region36
        $region35: #{tpu_custom_call.1} parent=11 // pred_region
          %335 = vsyncadd [#allocation10], 0
          %s337 = sshll.u32 %s7, 4
          %s338 = int_to_ptr.hbm [resolvable:$true] %s337
          %s339 = sshll.u32 [#allocation9], 4
          %s340 = int_to_ptr.vmem [resolvable:$true] %s339
          %342 = dma.hbm_to_vmem [thread:$0]  %s338, 128, %s340, [#allocation10]
        $region36: #{tpu_custom_call.1} parent=11 // pred_fallthru
          _
        // Predicated region
        $region37: #{tpu_custom_call.1} parent=11 // pred_check
          %p343 = pneg %p227
        $region38: #{tpu_custom_call.1} parent=11 // pred_check_branch
          %345 = sbr.rel (%p343) target = $region40
        $region39: #{tpu_custom_call.1} parent=11 // pred_region
          _
        $region40: #{tpu_custom_call.1} parent=11 // pred_fallthru
          _
      $region12: #{tpu_custom_call.1} parent=5 // pred_fallthru
        _
      %p346 = scmp.lt.s32.totalorder %s28, 2
      // Predicated region
      $region41: #{tpu_custom_call.1} parent=5 // pred_check
        %p347 = pneg %p346
      $region42: #{tpu_custom_call.1} parent=5 // pred_check_branch
        %349 = sbr.rel (%p347) target = $region44
      $region43: #{tpu_custom_call.1} parent=5 // pred_region
        // Predicated region
        $region45: #{tpu_custom_call.1} parent=43 // pred_check
          %p350 = pneg %p48
        $region46: #{tpu_custom_call.1} parent=43 // pred_check_branch
          %352 = sbr.rel (%p350) target = $region48
        $region47: #{tpu_custom_call.1} parent=43 // pred_region
          %p353 = scmp.lt.s32.totalorder %s28, 1
          %s354 = scalar_select %p353, %s28, 1
          %s355 = smul.addr %s354, 8
          %s356 = scalar_lea.vmem %s0, %s355
        $region48: #{tpu_custom_call.1} parent=43 // pred_fallthru
          _
        // Predicated region
        $region49: #{tpu_custom_call.1} parent=43 // pred_check
          %p357 = pneg %p74
        $region50: #{tpu_custom_call.1} parent=43 // pred_check_branch
          %359 = sbr.rel (%p357) target = $region52
        $region51: #{tpu_custom_call.1} parent=43 // pred_region
          %s360 = sand.u32 %s64, 1
          %s361 = scalar_lea.sflag [#allocation4], %s360
          %s362 = sand.u32 %s64, 1
          %s363 = scalar_lea.vmem [#allocation3], %s362
          %365 = vsyncadd %s361, 0
          %s366 = scalar_lea.hbm %s1, %s28
          %s368 = sshll.u32 %s366, 4
          %s369 = int_to_ptr.hbm [resolvable:$true] %s368
          %s370 = sshll.u32 %s363, 4
          %s371 = int_to_ptr.vmem [resolvable:$true] %s370
          %373 = dma.hbm_to_vmem [thread:$0]  %s369, 16, %s371, %s361
        $region52: #{tpu_custom_call.1} parent=43 // pred_fallthru
          _
      $region44: #{tpu_custom_call.1} parent=5 // pred_fallthru
        _
      %p374 = scmp.le.s32.totalorder 1, %s28
      %p375 = scmp.lt.s32.totalorder %s28, 3
      %p376 = pnand %p374, %p375
      %p377 = pneg %p376
      // Predicated region
      $region53: #{tpu_custom_call.1} parent=5 // pred_check
        _
      $region54: #{tpu_custom_call.1} parent=5 // pred_check_branch
        %379 = sbr.rel (%p376) target = $region56
      $region55: #{tpu_custom_call.1} parent=5 // pred_region
        %s380 = ssub.s32 %s28, 1
        %s381 = sand.u32 %s67, 1
        %s382 = scalar_lea.sflag [#allocation4], %s381
        %s383 = sand.u32 %s67, 1
        %s384 = scalar_lea.vmem [#allocation3], %s383
        // Predicated region
        $region57: #{tpu_custom_call.1} parent=55 // pred_check
          %p385 = pneg %p80
        $region58: #{tpu_custom_call.1} parent=55 // pred_check_branch
          %387 = sbr.rel (%p385) target = $region60
        $region59: #{tpu_custom_call.1} parent=55 // pred_region
          %389 = dma.done %s382, 16
        $region60: #{tpu_custom_call.1} parent=55 // pred_fallthru
          _
        // Predicated region
        $region61: #{tpu_custom_call.1} parent=55 // pred_check
          %p390 = pneg %p143
        $region62: #{tpu_custom_call.1} parent=55 // pred_check_branch
          %392 = sbr.rel (%p390) target = $region64
        $region63: #{tpu_custom_call.1} parent=55 // pred_region
          %394 = dma.done [#allocation7], 256
        $region64: #{tpu_custom_call.1} parent=55 // pred_fallthru
          _
        // Predicated region
        $region65: #{tpu_custom_call.1} parent=55 // pred_check
          %p395 = pneg %p164
        $region66: #{tpu_custom_call.1} parent=55 // pred_check_branch
          %397 = sbr.rel (%p395) target = $region68
        $region67: #{tpu_custom_call.1} parent=55 // pred_region
          %399 = dma.done [#allocation7], 256
        $region68: #{tpu_custom_call.1} parent=55 // pred_fallthru
          _
        // Predicated region
        $region69: #{tpu_custom_call.1} parent=55 // pred_check
          %p400 = pneg %p206
        $region70: #{tpu_custom_call.1} parent=55 // pred_check_branch
          %402 = sbr.rel (%p400) target = $region72
        $region71: #{tpu_custom_call.1} parent=55 // pred_region
          %404 = dma.done [#allocation10], 128
        $region72: #{tpu_custom_call.1} parent=55 // pred_fallthru
          _
        %p405 = scmp.lt.s32.totalorder %s33, 1
        %s406 = scalar_select %p405, %s33, 1
        %s407 = smul.addr %s406, 8
        %s408 = scalar_lea.vmem %s0, %s407
        %p409 = pneg %p54
        %p410 = pneg %p51
        %s411 = sand.u32 %s67, 1
        %s412 = scalar_lea.sflag [#allocation4], %s411
        %s413 = sand.u32 %s67, 1
        %s414 = scalar_lea.vmem [#allocation3], %s413
        %p415 = pneg %p80
        %p416 = pneg %p77
        %p417 = pneg %p101
        %p418 = pneg %p98
        %p419 = pneg %p122
        %p420 = pneg %p119
        %p421 = pneg %p143
        %p422 = pneg %p140
        %p423 = pneg %p164
        %p424 = pneg %p161
        %p425 = pneg %p185
        %p426 = pneg %p182
        %p427 = pneg %p206
        %p428 = pneg %p203
        %p429 = pneg %p227
        %p430 = pneg %p224
        %p431 = pneg %p253
        %p432 = pneg %p250
        %s433 = sand.u32 %s240, 1
        %s434 = scalar_lea.sflag [#allocation5], %s433
        %s435 = sand.u32 %s240, 1
        %s436 = smul.addr %s435, 8
        %s437 = scalar_lea.vmem [#allocation11], %s436
        %p438 = pneg %p279
        %p439 = pneg %p276
        %s440 = sand.u32 %s266, 1
        %s441 = scalar_lea.sflag [#allocation13], %s440
        %s442 = sand.u32 %s266, 1
        %s443 = smul.addr %s442, 2
        %s444 = scalar_lea.vmem [#allocation12], %s443
        %p445 = scmp.lt.s32.totalorder %s33, 1
        %s446 = scalar_select %p445, %s33, 1
        %s447 = smul.addr %s446, 8
        %s448 = scalar_lea.vmem %s0, %s447
        %v451 = vld [vmem:[%s448] sm:$0xff]
        %v452 = vld [vmem:[#allocation9] sm:$0x3f]
        %v453 = vpack.c.bf16 %v451, %v451
        %v454 = vld [vmem:[%s2] sm:$0xf]
        %v455 = vld [vmem:[%s2 + $0x4] sm:$0xf]
        %v456 = vld [vmem:[%s2 + $0x8] sm:$0xf]
        %v457 = vld [vmem:[%s2 + $0xc] sm:$0xf]
        %v462 = vunpack.c.l.b16 %v454
        %v463 = vunpack.c.l.b16 %v455
        %v464 = vunpack.c.l.b16 %v456
        %v465 = vunpack.c.l.b16 %v457
        %v466 = vpack.c.b16 %v463, %v462
        %v467 = vpack.c.b16 %v465, %v464
        %vm470 = vcmask 261120
        %v472 = vsel %vm470, %v453, 0
        %474 = vmatpush.bf16.msra.mxu0 0
        %475 = vmatpush.bf16.msra.mxu0 0
        %476 = vmatpush.bf16.msra.mxu0 0
        %477 = vmatpush.bf16.msra.mxu0 0
        %478 = vmatpush.bf16.msra.mxu0 0
        %479 = vmatpush.bf16.msra.mxu0 0
        %480 = vmatpush.bf16.msra.mxu0 %v467
        %481 = vmatpush.bf16.msra.mxu0 %v466
        %482 = vmatmul.bf16.gmra.mxu0 %v472
        %v483 = vpop.f32.mrf.mxu0
        %v484 = vadd.f32 0.0, %v483
        %v485 = vpop.f32.mrf.mxu0
        %486 = vdwg.mxu0
        %v487 = vld [vmem:[%s3] sm:$0xf]
        %v488 = vld [vmem:[%s3 + $0x4] sm:$0xf]
        %v489 = vld [vmem:[%s3 + $0x8] sm:$0xf]
        %v490 = vld [vmem:[%s3 + $0xc] sm:$0xf]
        %v495 = vunpack.c.l.b16 %v487
        %v496 = vunpack.c.l.b16 %v488
        %v497 = vunpack.c.l.b16 %v489
        %v498 = vunpack.c.l.b16 %v490
        %v499 = vpack.c.b16 %v496, %v495
        %v500 = vpack.c.b16 %v498, %v497
        %503 = vmatpush.bf16.msra.mxu0 0
        %504 = vmatpush.bf16.msra.mxu0 0
        %505 = vmatpush.bf16.msra.mxu0 0
        %506 = vmatpush.bf16.msra.mxu0 0
        %507 = vmatpush.bf16.msra.mxu0 0
        %508 = vmatpush.bf16.msra.mxu0 0
        %509 = vmatpush.bf16.msra.mxu0 %v500
        %510 = vmatpush.bf16.msra.mxu0 %v499
        %511 = vmatmul.bf16.gmra.mxu0 %v472
        %v512 = vpop.f32.mrf.mxu0
        %v513 = vadd.f32 0.0, %v512
        %v514 = vpop.f32.mrf.mxu0
        %515 = vdwg.mxu0
        %v516 = vpack.c.bf16 %v484, %v484
        %v517 = vpack.c.bf16 %v513, %v513
        %vm518 = vcmask 64512
        %v520 = vsel %vm518, %v516, 0
        %v523 = vsel %vm518, %v517, 0
        %525 = vmatpush.bf16.xpose.msra.mxu0 0
        %526 = vmatpush.bf16.xpose.msra.mxu0 0
        %527 = vmatpush.bf16.xpose.msra.mxu0 0
        %528 = vmatpush.bf16.xpose.msra.mxu0 0
        %529 = vmatpush.bf16.xpose.msra.mxu0 0
        %530 = vmatpush.bf16.xpose.msra.mxu0 0
        %531 = vmatpush.bf16.xpose.msra.mxu0 0
        %532 = vmatpush.bf16.xpose.msra.mxu0 %v523
        %533 = vmatmul.bf16.gmra.mxu0 %v520
        %v534 = vpop.f32.mrf.mxu0
        %v535 = vadd.f32 0.0, %v534
        %v536 = vpop.f32.mrf.mxu0
        %537 = vdwg.mxu0
        %v538 = vmul.f32 %v535, 0.35355338
        %v539 = vsel %vm518, %v538, -inf
        %540 = vmax.xlane.f32.xlu0 %v539
        %v541 = vpop.xlane.xlu0 %540
        %v542 = vsub.f32 %v538, %v541
        %v543 = vmul.f32 %v542, 1.442695
        %v544 = vpow.pop %v543
        %v545 = vsel %vm518, %v544, 0.0
        %546 = vadd.xlane.f32.xlu0 %v545
        %v547 = vpop.xlane.xlu0 %546
        %v548 = vrcp.pop %v547
        %v549 = vmul.f32 %v544, %v548
        %v550 = vpack.c.bf16 %v549, %v549
        %552 = vrot.lane.b32.xlu0 %v517, 96
        %v553 = vpop.permute.xlu0 %552
        %v555 = vsel %vm518, %v550, 0
        %vm557 = vcmask 1043456
        %v559 = vsel %vm557, %v553, 0
        %561 = vmatpush.bf16.msra.mxu0 0
        %562 = vmatpush.bf16.msra.mxu0 0
        %563 = vmatpush.bf16.msra.mxu0 0
        %564 = vmatpush.bf16.msra.mxu0 0
        %565 = vmatpush.bf16.msra.mxu0 0
        %566 = vmatpush.bf16.msra.mxu0 0
        %567 = vmatpush.bf16.msra.mxu0 0
        %568 = vmatpush.bf16.msra.mxu0 %v559
        %569 = vmatmul.bf16.gmra.mxu0 %v555
        %v570 = vpop.f32.mrf.mxu0
        %v571 = vadd.f32 0.0, %v570
        %v572 = vpop.f32.mrf.mxu0
        %573 = vdwg.mxu0
        %574 = vst.msk [vmem:[#allocation2] sm:$0xff] %vm518, %v571
        %576 = vrot.lane.b32.xlu0 %v516, 120
        %v577 = vpop.permute.xlu0 %576
        %578 = vrot.lane.b32.xlu0 %v517, 120
        %v579 = vpop.permute.xlu0 %578
        %v581 = vsel %vm518, %v577, 0
        %v584 = vsel %vm518, %v579, 0
        %586 = vmatpush.bf16.xpose.msra.mxu0 0
        %587 = vmatpush.bf16.xpose.msra.mxu0 0
        %588 = vmatpush.bf16.xpose.msra.mxu0 0
        %589 = vmatpush.bf16.xpose.msra.mxu0 0
        %590 = vmatpush.bf16.xpose.msra.mxu0 0
        %591 = vmatpush.bf16.xpose.msra.mxu0 0
        %592 = vmatpush.bf16.xpose.msra.mxu0 0
        %593 = vmatpush.bf16.xpose.msra.mxu0 %v584
        %594 = vmatmul.bf16.gmra.mxu0 %v581
        %v595 = vpop.f32.mrf.mxu0
        %v596 = vadd.f32 0.0, %v595
        %v597 = vpop.f32.mrf.mxu0
        %598 = vdwg.mxu0
        %v599 = vmul.f32 %v596, 0.35355338
        %v600 = vsel %vm518, %v599, -inf
        %601 = vmax.xlane.f32.xlu0 %v600
        %v602 = vpop.xlane.xlu0 %601
        %v603 = vsub.f32 %v599, %v602
        %v604 = vmul.f32 %v603, 1.442695
        %v605 = vpow.pop %v604
        %v606 = vsel %vm518, %v605, 0.0
        %607 = vadd.xlane.f32.xlu0 %v606
        %v608 = vpop.xlane.xlu0 %607
        %v609 = vrcp.pop %v608
        %v610 = vmul.f32 %v605, %v609
        %v611 = vpack.c.bf16 %v610, %v610
        %v613 = vsel %vm518, 1065369472, 0
        %v616 = vsel %vm557, %v611, 0
        %618 = vmatpush.bf16.msra.mxu0 0
        %619 = vmatpush.bf16.msra.mxu0 0
        %620 = vmatpush.bf16.msra.mxu0 0
        %621 = vmatpush.bf16.msra.mxu0 0
        %622 = vmatpush.bf16.msra.mxu0 0
        %623 = vmatpush.bf16.msra.mxu0 0
        %624 = vmatpush.bf16.msra.mxu0 0
        %625 = vmatpush.bf16.msra.mxu0 %v616
        %626 = vmatmul.bf16.gmra.mxu0 %v613
        %v627 = vpop.f32.mrf.mxu0
        %v628 = vadd.f32 0.0, %v627
        %v629 = vpop.f32.mrf.mxu0
        %630 = vdwg.mxu0
        %v631 = vsel %vm557, %v550, 0
        %633 = vmatpush.bf16.msra.mxu0 0
        %634 = vmatpush.bf16.msra.mxu0 0
        %635 = vmatpush.bf16.msra.mxu0 0
        %636 = vmatpush.bf16.msra.mxu0 0
        %637 = vmatpush.bf16.msra.mxu0 0
        %638 = vmatpush.bf16.msra.mxu0 0
        %639 = vmatpush.bf16.msra.mxu0 0
        %640 = vmatpush.bf16.msra.mxu0 %v631
        %641 = vmatmul.bf16.gmra.mxu0 %v613
        %v642 = vpop.f32.mrf.mxu0
        %v643 = vadd.f32 %v628, %v642
        %v644 = vpop.f32.mrf.mxu0
        %645 = vdwg.mxu0
        %646 = vrot.lane.b32.xlu0 %v517, 88
        %v647 = vpop.permute.xlu0 %646
        %v648 = vsel %vm518, %v611, 0
        %v651 = vsel %vm557, %v647, 0
        %653 = vmatpush.bf16.msra.mxu0 0
        %654 = vmatpush.bf16.msra.mxu0 0
        %655 = vmatpush.bf16.msra.mxu0 0
        %656 = vmatpush.bf16.msra.mxu0 0
        %657 = vmatpush.bf16.msra.mxu0 0
        %658 = vmatpush.bf16.msra.mxu0 0
        %659 = vmatpush.bf16.msra.mxu0 0
        %660 = vmatpush.bf16.msra.mxu0 %v651
        %661 = vmatmul.bf16.gmra.mxu0 %v648
        %v662 = vpop.f32.mrf.mxu0
        %v663 = vadd.f32 0.0, %v662
        %v664 = vpop.f32.mrf.mxu0
        %665 = vdwg.mxu0
        %667 = vrot.lane.b32.xlu0 %v663, 8
        %v668 = vpop.permute.xlu0 %667
        %vm670 = vcmask 130112
        %671 = vst.msk [vmem:[#allocation2] sm:$0xff] %vm670, %v668
        %672 = vrot.lane.b32.xlu0 %v516, 112
        %v673 = vpop.permute.xlu0 %672
        %674 = vrot.lane.b32.xlu0 %v517, 112
        %v675 = vpop.permute.xlu0 %674
        %v677 = vsel %vm518, %v673, 0
        %v680 = vsel %vm518, %v675, 0
        %682 = vmatpush.bf16.xpose.msra.mxu0 0
        %683 = vmatpush.bf16.xpose.msra.mxu0 0
        %684 = vmatpush.bf16.xpose.msra.mxu0 0
        %685 = vmatpush.bf16.xpose.msra.mxu0 0
        %686 = vmatpush.bf16.xpose.msra.mxu0 0
        %687 = vmatpush.bf16.xpose.msra.mxu0 0
        %688 = vmatpush.bf16.xpose.msra.mxu0 0
        %689 = vmatpush.bf16.xpose.msra.mxu0 %v680
        %690 = vmatmul.bf16.gmra.mxu0 %v677
        %v691 = vpop.f32.mrf.mxu0
        %v692 = vadd.f32 0.0, %v691
        %v693 = vpop.f32.mrf.mxu0
        %694 = vdwg.mxu0
        %v695 = vmul.f32 %v692, 0.35355338
        %v696 = vsel %vm518, %v695, -inf
        %697 = vmax.xlane.f32.xlu0 %v696
        %v698 = vpop.xlane.xlu0 %697
        %v699 = vsub.f32 %v695, %v698
        %v700 = vmul.f32 %v699, 1.442695
        %v701 = vpow.pop %v700
        %v702 = vsel %vm518, %v701, 0.0
        %703 = vadd.xlane.f32.xlu0 %v702
        %v704 = vpop.xlane.xlu0 %703
        %v705 = vrcp.pop %v704
        %v706 = vmul.f32 %v701, %v705
        %v707 = vpack.c.bf16 %v706, %v706
        %v709 = vsel %vm557, %v707, 0
        %711 = vmatpush.bf16.msra.mxu0 0
        %712 = vmatpush.bf16.msra.mxu0 0
        %713 = vmatpush.bf16.msra.mxu0 0
        %714 = vmatpush.bf16.msra.mxu0 0
        %715 = vmatpush.bf16.msra.mxu0 0
        %716 = vmatpush.bf16.msra.mxu0 0
        %717 = vmatpush.bf16.msra.mxu0 0
        %718 = vmatpush.bf16.msra.mxu0 %v709
        %719 = vmatmul.bf16.gmra.mxu0 %v613
        %v720 = vpop.f32.mrf.mxu0
        %v721 = vadd.f32 0.0, %v720
        %v722 = vpop.f32.mrf.mxu0
        %723 = vdwg.mxu0
        %v724 = vadd.f32 %v643, %v721
        %725 = vrot.lane.b32.xlu0 %v517, 80
        %v726 = vpop.permute.xlu0 %725
        %v727 = vsel %vm518, %v707, 0
        %v730 = vsel %vm557, %v726, 0
        %732 = vmatpush.bf16.msra.mxu0 0
        %733 = vmatpush.bf16.msra.mxu0 0
        %734 = vmatpush.bf16.msra.mxu0 0
        %735 = vmatpush.bf16.msra.mxu0 0
        %736 = vmatpush.bf16.msra.mxu0 0
        %737 = vmatpush.bf16.msra.mxu0 0
        %738 = vmatpush.bf16.msra.mxu0 0
        %739 = vmatpush.bf16.msra.mxu0 %v730
        %740 = vmatmul.bf16.gmra.mxu0 %v727
        %v741 = vpop.f32.mrf.mxu0
        %v742 = vadd.f32 0.0, %v741
        %v743 = vpop.f32.mrf.mxu0
        %744 = vdwg.mxu0
        %746 = vrot.lane.b32.xlu0 %v742, 16
        %v747 = vpop.permute.xlu0 %746
        %vm749 = vcmask 195712
        %750 = vst.msk [vmem:[#allocation2] sm:$0xff] %vm749, %v747
        %751 = vrot.lane.b32.xlu0 %v516, 104
        %v752 = vpop.permute.xlu0 %751
        %753 = vrot.lane.b32.xlu0 %v517, 104
        %v754 = vpop.permute.xlu0 %753
        %v756 = vsel %vm518, %v752, 0
        %v759 = vsel %vm518, %v754, 0
        %761 = vmatpush.bf16.xpose.msra.mxu0 0
        %762 = vmatpush.bf16.xpose.msra.mxu0 0
        %763 = vmatpush.bf16.xpose.msra.mxu0 0
        %764 = vmatpush.bf16.xpose.msra.mxu0 0
        %765 = vmatpush.bf16.xpose.msra.mxu0 0
        %766 = vmatpush.bf16.xpose.msra.mxu0 0
        %767 = vmatpush.bf16.xpose.msra.mxu0 0
        %768 = vmatpush.bf16.xpose.msra.mxu0 %v759
        %769 = vmatmul.bf16.gmra.mxu0 %v756
        %v770 = vpop.f32.mrf.mxu0
        %v771 = vadd.f32 0.0, %v770
        %v772 = vpop.f32.mrf.mxu0
        %773 = vdwg.mxu0
        %v774 = vmul.f32 %v771, 0.35355338
        %v775 = vsel %vm518, %v774, -inf
        %776 = vmax.xlane.f32.xlu0 %v775
        %v777 = vpop.xlane.xlu0 %776
        %v778 = vsub.f32 %v774, %v777
        %v779 = vmul.f32 %v778, 1.442695
        %v780 = vpow.pop %v779
        %v781 = vsel %vm518, %v780, 0.0
        %782 = vadd.xlane.f32.xlu0 %v781
        %v783 = vpop.xlane.xlu0 %782
        %v784 = vrcp.pop %v783
        %v785 = vmul.f32 %v780, %v784
        %v786 = vpack.c.bf16 %v785, %v785
        %v788 = vsel %vm557, %v786, 0
        %790 = vmatpush.bf16.msra.mxu0 0
        %791 = vmatpush.bf16.msra.mxu0 0
        %792 = vmatpush.bf16.msra.mxu0 0
        %793 = vmatpush.bf16.msra.mxu0 0
        %794 = vmatpush.bf16.msra.mxu0 0
        %795 = vmatpush.bf16.msra.mxu0 0
        %796 = vmatpush.bf16.msra.mxu0 0
        %797 = vmatpush.bf16.msra.mxu0 %v788
        %798 = vmatmul.bf16.gmra.mxu0 %v613
        %v799 = vpop.f32.mrf.mxu0
        %v800 = vadd.f32 0.0, %v799
        %v801 = vpop.f32.mrf.mxu0
        %802 = vdwg.mxu0
        %v803 = vadd.f32 %v724, %v800
        %804 = vrot.lane.b32.xlu0 %v517, 72
        %v805 = vpop.permute.xlu0 %804
        %v806 = vsel %vm518, %v786, 0
        %v809 = vsel %vm557, %v805, 0
        %811 = vmatpush.bf16.msra.mxu0 0
        %812 = vmatpush.bf16.msra.mxu0 0
        %813 = vmatpush.bf16.msra.mxu0 0
        %814 = vmatpush.bf16.msra.mxu0 0
        %815 = vmatpush.bf16.msra.mxu0 0
        %816 = vmatpush.bf16.msra.mxu0 0
        %817 = vmatpush.bf16.msra.mxu0 0
        %818 = vmatpush.bf16.msra.mxu0 %v809
        %819 = vmatmul.bf16.gmra.mxu0 %v806
        %v820 = vpop.f32.mrf.mxu0
        %v821 = vadd.f32 0.0, %v820
        %v822 = vpop.f32.mrf.mxu0
        %823 = vdwg.mxu0
        %825 = vrot.lane.b32.xlu0 %v821, 24
        %v826 = vpop.permute.xlu0 %825
        %vm828 = vcmask 261312
        %829 = vst.msk [vmem:[#allocation2] sm:$0xff] %vm828, %v826
        %v830 = vld [vmem:[#allocation2] sm:$0xff]
        %v831 = vpack.c.bf16 %v830, %v830
        %v832 = vld [vmem:[#allocation6] sm:$0xf]
        %v833 = vld [vmem:[#allocation6 + $0x4] sm:$0xf]
        %v834 = vld [vmem:[#allocation6 + $0x8] sm:$0xf]
        %v835 = vld [vmem:[#allocation6 + $0xc] sm:$0xf]
        %v840 = vunpack.c.l.b16 %v832
        %v841 = vunpack.c.l.b16 %v833
        %v842 = vunpack.c.l.b16 %v834
        %v843 = vunpack.c.l.b16 %v835
        %v844 = vpack.c.b16 %v841, %v840
        %v845 = vpack.c.b16 %v843, %v842
        %v849 = vsel %vm470, %v831, 0
        %851 = vmatpush.bf16.msra.mxu0 0
        %852 = vmatpush.bf16.msra.mxu0 0
        %853 = vmatpush.bf16.msra.mxu0 0
        %854 = vmatpush.bf16.msra.mxu0 0
        %855 = vmatpush.bf16.msra.mxu0 0
        %856 = vmatpush.bf16.msra.mxu0 0
        %857 = vmatpush.bf16.msra.mxu0 %v845
        %858 = vmatpush.bf16.msra.mxu0 %v844
        %859 = vmatmul.bf16.gmra.mxu0 %v849
        %v860 = vpop.f32.mrf.mxu0
        %v861 = vadd.f32 0.0, %v860
        %v862 = vpop.f32.mrf.mxu0
        %863 = vdwg.mxu0
        %v864 = vadd.f32 %v451, %v861
        %v865 = vperm.slane %v452, 0
        %v866 = vadd.f32 %v864, %v865
        %v867 = vsel %vm470, %v866, 0.0
        %868 = vadd.xlane.f32.xlu0 %v867
        %v869 = vpop.xlane.xlu0 %868
        %v870 = vrcp.pop 32.0
        %v871 = vmul.f32 32.0, %v870
        %v872 = vsub.f32 1.0, %v871
        %v873 = vmul.f32 %v870, %v872
        %v874 = vadd.f32 %v870, %v873
        %vm875 = vweird.f32 %v870
        %v876 = vsel %vm875, %v870, %v874
        %v877 = vmul.f32 %v869, %v876
        %v878 = vsub.f32 %v866, %v877
        %v879 = vmul.f32 %v878, %v878
        %v880 = vsel %vm470, %v879, 0.0
        %881 = vadd.xlane.f32.xlu0 %v880
        %v882 = vpop.xlane.xlu0 %881
        %v883 = vmul.f32 %v882, %v876
        %v884 = vadd.f32 %v883, 1e-05
        %v885 = vrsqrt.pop %v884
        %v886 = vmul.f32 %v885, %v884
        %v887 = vmul.f32 %v886, %v885
        %v888 = vmul.f32 0.5, %v887
        %v889 = vsub.f32 1.5, %v888
        %v890 = vmul.f32 %v885, %v889
        %vm891 = vweird.f32 %v884
        %vm892 = vweird.f32 %v885
        %vm893 = vmor %vm891, %vm892
        %v894 = vsel %vm893, %v885, %v890
        %v895 = vmul.f32 %v878, %v894
        %v896 = vperm.slane %v452, 2
        %v897 = vmul.f32 %v895, %v896
        %v898 = vperm.slane %v452, 3
        %v899 = vadd.f32 %v897, %v898
        %v900 = vpack.c.bf16 %v899, %v899
        %v901 = vld [vmem:[#allocation8] sm:$0xf]
        %v902 = vld [vmem:[#allocation8 + $0x4] sm:$0xf]
        %v903 = vld [vmem:[#allocation8 + $0x8] sm:$0xf]
        %v904 = vld [vmem:[#allocation8 + $0xc] sm:$0xf]
        %v905 = vld [vmem:[%s8] sm:$0x1]
        %v907 = vperm.slane %v905, 0
        %v913 = vunpack.c.l.b16 %v901
        %v914 = vunpack.c.l.b16 %v902
        %v915 = vunpack.c.l.b16 %v903
        %v916 = vunpack.c.l.b16 %v904
        %v917 = vpack.c.b16 %v914, %v913
        %v918 = vpack.c.b16 %v916, %v915
        %v922 = vsel %vm470, %v900, 0
        %924 = vmatpush.bf16.msra.mxu0 0
        %925 = vmatpush.bf16.msra.mxu0 0
        %926 = vmatpush.bf16.msra.mxu0 0
        %927 = vmatpush.bf16.msra.mxu0 0
        %928 = vmatpush.bf16.msra.mxu0 0
        %929 = vmatpush.bf16.msra.mxu0 0
        %930 = vmatpush.bf16.msra.mxu0 %v918
        %931 = vmatpush.bf16.msra.mxu0 %v917
        %932 = vmatmul.bf16.gmra.mxu0 %v922
        %v933 = vpop.f32.mrf.mxu0
        %v934 = vadd.f32 %v907, %v933
        %v935 = vpop.f32.mrf.mxu0
        %936 = vdwg.mxu0
        %v937 = vmax.f32 %v934, 0.0
        %v938 = vpack.c.bf16 %v937, %v937
        %v939 = vld [vmem:[%s6] sm:$0xf]
        %v940 = vld [vmem:[%s6 + $0x4] sm:$0xf]
        %v941 = vld [vmem:[%s6 + $0x8] sm:$0xf]
        %v942 = vld [vmem:[%s6 + $0xc] sm:$0xf]
        %v943 = vld [vmem:[%s6 + $0x10] sm:$0xf]
        %v944 = vld [vmem:[%s6 + $0x14] sm:$0xf]
        %v945 = vld [vmem:[%s6 + $0x18] sm:$0xf]
        %v946 = vld [vmem:[%s6 + $0x1c] sm:$0xf]
        %v947 = vperm.slane %v452, 1
        %v956 = vunpack.c.l.b16 %v939
        %v957 = vunpack.c.l.b16 %v940
        %v958 = vunpack.c.l.b16 %v941
        %v959 = vunpack.c.l.b16 %v942
        %v960 = vunpack.c.l.b16 %v943
        %v961 = vunpack.c.l.b16 %v944
        %v962 = vunpack.c.l.b16 %v945
        %v963 = vunpack.c.l.b16 %v946
        %v964 = vpack.c.b16 %v957, %v956
        %v965 = vpack.c.b16 %v959, %v958
        %v966 = vpack.c.b16 %v961, %v960
        %v967 = vpack.c.b16 %v963, %v962
        %vm972 = vcmask 523264
        %v974 = vsel %vm972, %v938, 0
        %976 = vmatpush.bf16.msra.mxu0 0
        %977 = vmatpush.bf16.msra.mxu0 0
        %978 = vmatpush.bf16.msra.mxu0 0
        %979 = vmatpush.bf16.msra.mxu0 0
        %980 = vmatpush.bf16.msra.mxu0 %v967
        %981 = vmatpush.bf16.msra.mxu0 %v966
        %982 = vmatpush.bf16.msra.mxu0 %v965
        %983 = vmatpush.bf16.msra.mxu0 %v964
        %984 = vmatmul.bf16.gmra.mxu0 %v974
        %v985 = vpop.f32.mrf.mxu0
        %v986 = vadd.f32 %v947, %v985
        %v987 = vpop.f32.mrf.mxu0
        %988 = vdwg.mxu0
        %v989 = vadd.f32 %v899, %v986
        %v990 = vsel %vm470, %v989, 0.0
        %991 = vadd.xlane.f32.xlu0 %v990
        %v992 = vpop.xlane.xlu0 %991
        %v993 = vmul.f32 %v992, %v876
        %v994 = vsub.f32 %v989, %v993
        %v995 = vmul.f32 %v994, %v994
        %v996 = vsel %vm470, %v995, 0.0
        %997 = vadd.xlane.f32.xlu0 %v996
        %v998 = vpop.xlane.xlu0 %997
        %v999 = vmul.f32 %v998, %v876
        %v1000 = vadd.f32 %v999, 1e-05
        %v1001 = vrsqrt.pop %v1000
        %v1002 = vmul.f32 %v1001, %v1000
        %v1003 = vmul.f32 %v1002, %v1001
        %v1004 = vmul.f32 0.5, %v1003
        %v1005 = vsub.f32 1.5, %v1004
        %v1006 = vmul.f32 %v1001, %v1005
        %vm1007 = vweird.f32 %v1000
        %vm1008 = vweird.f32 %v1001
        %vm1009 = vmor %vm1007, %vm1008
        %v1010 = vsel %vm1009, %v1001, %v1006
        %v1011 = vmul.f32 %v994, %v1010
        %v1012 = vperm.slane %v452, 4
        %v1013 = vmul.f32 %v1011, %v1012
        %v1014 = vperm.slane %v452, 5
        %v1015 = vadd.f32 %v1013, %v1014
        %v1016 = vmul.f32 %v803, 0.25
        %vm1017 = vcmask 57344
        %v1018 = vsel %vm1017, %v1016, -inf
        %1019 = vmax.xlane.f32.xlu0 %v1018
        %v1020 = vpop.xlane.xlu0 %1019
        %v1021 = vsub.f32 %v1016, %v1020
        %v1022 = vmul.f32 %v1021, 1.442695
        %v1023 = vpow.pop %v1022
        %v1024 = vsel %vm1017, %v1023, 0.0
        %1025 = vadd.xlane.f32.xlu0 %v1024
        %v1026 = vpop.xlane.xlu0 %1025
        %v1027 = vrcp.pop %v1026
        %v1028 = vmul.f32 %v1026, %v1027
        %v1029 = vsub.f32 1.0, %v1028
        %v1030 = vmul.f32 %v1027, %v1029
        %v1031 = vadd.f32 %v1027, %v1030
        %vm1032 = vweird.f32 %v1026
        %vm1033 = vweird.f32 %v1027
        %vm1034 = vmor %vm1032, %vm1033
        %v1035 = vsel %vm1034, %v1027, %v1031
        %v1036 = vand.u32 2147483647, %v1026
        %vm1037 = vcmp.eq.f32.partialorder %v1036, 8.507059e+37
        %v1038 = vand.u32 %v1026, 2147483648
        %v1039 = vor.u32 1.1754944e-38, %v1038
        %v1040 = vsel %vm1037, %v1039, %v1035
        %v1041 = vmul.f32 %v1023, %v1040
        %1042 = vst.msk [vmem:[%s437] sm:$0xff] %vm470, %v1015
        %v1043 = vld [vmem:[%s384] sm:$0x1]
        %v1044 = vadd.f32 %v1043, %v1041
        %v1046 = vrot.slane %v1041, 7
        %vm1048 = vcmask 1040384
        %v1049 = vsel %vm1048, %v1044, %v1046
        %vm1050 = vcmask 58368
        %1051 = vst.msk [vmem:[%s444] sm:$0x3] %vm1050, %v1049
        %s1052 = sand.u32 %s240, 1
        %s1053 = scalar_lea.sflag [#allocation5], %s1052
        %s1054 = sand.u32 %s240, 1
        %s1055 = smul.addr %s1054, 8
        %s1056 = scalar_lea.vmem [#allocation11], %s1055
        %s1057 = sand.u32 %s266, 1
        %s1058 = scalar_lea.sflag [#allocation13], %s1057
        %s1059 = sand.u32 %s266, 1
        %s1060 = smul.addr %s1059, 2
        %s1061 = scalar_lea.vmem [#allocation12], %s1060
        // Predicated region
        $region73: #{tpu_custom_call.1} parent=55 // pred_check
          %p1062 = pneg %p250
        $region74: #{tpu_custom_call.1} parent=55 // pred_check_branch
          %1064 = sbr.rel (%p1062) target = $region76
        $region75: #{tpu_custom_call.1} parent=55 // pred_region
          %1066 = vsyncadd %s1053, 0
          %s1067 = smul.addr %s33, 8
          %s1068 = scalar_lea.hbm %s9, %s1067
          %s1070 = sshll.u32 %s1056, 4
          %s1071 = int_to_ptr.vmem [resolvable:$true] %s1070
          %s1072 = sshll.u32 %s1068, 4
          %s1073 = int_to_ptr.hbm [resolvable:$true] %s1072
          %1075 = dma.vmem_to_hbm [thread:$0]  %s1071, 128, %s1073, %s1053
        $region76: #{tpu_custom_call.1} parent=55 // pred_fallthru
          _
        // Predicated region
        $region77: #{tpu_custom_call.1} parent=55 // pred_check
          %p1076 = pneg %p276
        $region78: #{tpu_custom_call.1} parent=55 // pred_check_branch
          %1078 = sbr.rel (%p1076) target = $region80
        $region79: #{tpu_custom_call.1} parent=55 // pred_region
          %1080 = vsyncadd %s1058, 0
          %s1081 = smul.addr %s33, 2
          %s1082 = scalar_lea.hbm %s10, %s1081
          %s1084 = sshll.u32 %s1061, 4
          %s1085 = int_to_ptr.vmem [resolvable:$true] %s1084
          %s1086 = sshll.u32 %s1082, 4
          %s1087 = int_to_ptr.hbm [resolvable:$true] %s1086
          %1089 = dma.vmem_to_hbm [thread:$0]  %s1085, 32, %s1087, %s1058
        $region80: #{tpu_custom_call.1} parent=55 // pred_fallthru
          _
      $region56: #{tpu_custom_call.1} parent=5 // pred_fallthru
        _
      %p1090 = scmp.le.s32.totalorder 2, %s28
      // Predicated region
      $region81: #{tpu_custom_call.1} parent=5 // pred_check
        %p1091 = pneg %p1090
      $region82: #{tpu_custom_call.1} parent=5 // pred_check_branch
        %1093 = sbr.rel (%p1091) target = $region84
      $region83: #{tpu_custom_call.1} parent=5 // pred_region
        %s1094 = ssub.s32 %s28, 2
        // Predicated region
        $region85: #{tpu_custom_call.1} parent=83 // pred_check
          %p1095 = pneg %p256
        $region86: #{tpu_custom_call.1} parent=83 // pred_check_branch
          %1097 = sbr.rel (%p1095) target = $region88
        $region87: #{tpu_custom_call.1} parent=83 // pred_region
          %s1098 = sand.u32 %s241, 1
          %s1099 = scalar_lea.sflag [#allocation5], %s1098
          %s1100 = sand.u32 %s241, 1
          %s1101 = smul.addr %s1100, 8
          %s1102 = scalar_lea.vmem [#allocation11], %s1101
          %1104 = dma.done %s1099, 128
        $region88: #{tpu_custom_call.1} parent=83 // pred_fallthru
          _
        // Predicated region
        $region89: #{tpu_custom_call.1} parent=83 // pred_check
          %p1105 = pneg %p282
        $region90: #{tpu_custom_call.1} parent=83 // pred_check_branch
          %1107 = sbr.rel (%p1105) target = $region92
        $region91: #{tpu_custom_call.1} parent=83 // pred_region
          %s1108 = sand.u32 %s267, 1
          %s1109 = scalar_lea.sflag [#allocation13], %s1108
          %s1110 = sand.u32 %s267, 1
          %s1111 = smul.addr %s1110, 2
          %s1112 = scalar_lea.vmem [#allocation12], %s1111
          %1114 = dma.done %s1109, 32
        $region92: #{tpu_custom_call.1} parent=83 // pred_fallthru
          _
      $region84: #{tpu_custom_call.1} parent=5 // pred_fallthru
        _
    $region6: #{tpu_custom_call.1} parent=1 // loop_footer
      %s32 = sadd.s32 1, %s28
    $region7: #{tpu_custom_call.1} parent=1 // loop_footer_branch
      %27 = sbr.rel target = $region3
    $region8: #{tpu_custom_call.1} parent=1 // loop_exit
      _
    %1115 = vsyncpa [#allocation4], 1
    %s1116 = scalar_lea.sflag [#allocation4], 1
    %1117 = vsyncpa %s1116, 1
    %1118 = vsyncpa [#allocation7], 1
    %1119 = vsyncpa [#allocation10], 1
    %1120 = vsyncpa [#allocation5], 1
    %s1121 = scalar_lea.sflag [#allocation5], 1
    %1122 = vsyncpa %s1121, 1
    %1123 = vsyncpa [#allocation13], 1
    %s1124 = scalar_lea.sflag [#allocation13], 1
    %1125 = vsyncpa %s1124, 1

</llo_original>
